<compile_context>
chip_gen: v7x
topology: tpu7x:2x2x1
jax: 0.10.0
libtpu: 0.0.40
codegen_flags: <defaults>
</compile_context>

<pallas_src>
import jax
import jax.numpy as jnp
from jax.experimental import pallas as pl
from jax.experimental.pallas import tpu as pltpu

NUM_BOND_TYPE = 6
NUM_BOND_DIRECTION = 3
LANE = 128


# ---------------------------------------------------------------------------
# Pallas kernel: Gb graphs per grid step, fused bf16-MXU / f32-accumulate
# chain, single lane-dense bf16 store.
# ---------------------------------------------------------------------------
def gnn_decoder_kernel(
    a_ref,       # SMEM (1, 1)     f32  PReLU slope
    x_ref,       # (1, R, Hp)      bf16 node features (R = Gb*Np, padded)
    p_ref,       # (1, R, R)       bf16 block-diag adjacency (keep-mask folded)
    invdeg_ref,  # (1, R, 1)       f32  1/deg (0 on padded rows)
    eagg_ref,    # (1, R, Hp)      f32  (A @ edge_embeddings) / deg
    wenc_ref,    # (Hp, Hp)        bf16 enc_to_dec weight (no bias)
    w1_ref,      # (Hp, Mp)        bf16 GIN mlp layer 1
    b1_ref,      # (1, Mp)         f32
    w2_ref,      # (Mp, Hp)        bf16 GIN mlp layer 2
    b2_ref,      # (1, Hp)         f32
    wout_ref,    # (Hp, Op)        bf16 out_layer
    bout_ref,    # (1, Op)         f32
    out_ref,     # (1, R, Op)      bf16
):
    a = a_ref[0, 0]
    x = x_ref[0]                                           # bf16 (R, Hp)

    # PReLU in bf16 (native bf16 VPU on v6e/v7x; MXU input is bf16 anyway).
    x = jnp.where(x > 0, x, a.astype(x.dtype) * x)

    # enc_to_dec (Linear, bias=False). x[mask]=0 folded into P's columns.
    x_enc = jnp.dot(x, wenc_ref[...], preferred_element_type=jnp.float32)

    # GIN message + mean aggregation (one block-diagonal MXU matmul):
    #   agg = (A @ x_enc) * (1/deg) + (A @ eemb) / deg
    agg = (
        jnp.dot(p_ref[0], x_enc.astype(jnp.bfloat16),
                preferred_element_type=jnp.float32)
        * invdeg_ref[0]
        + eagg_ref[0]
    )

    # GIN update MLP: Linear(H, 2H) -> ReLU -> Linear(2H, H)
    h = (
        jnp.dot(agg.astype(jnp.bfloat16), w1_ref[...],
                preferred_element_type=jnp.float32)
        + b1_ref[...]
    )
    h = jnp.maximum(h, 0.0)
    h = (
        jnp.dot(h.astype(jnp.bfloat16), w2_ref[...],
                preferred_element_type=jnp.float32)
        + b2_ref[...]
    )

    # out_layer (single lane-dense bf16 store)
    out = (
        jnp.dot(h.astype(jnp.bfloat16), wout_ref[...],
                preferred_element_type=jnp.float32)
        + bout_ref[...]
    )
    out_ref[0] = out.astype(out_ref.dtype)


# ---------------------------------------------------------------------------
# Wrapper glue (plain JAX): self loops, edge-embedding gather, index-based
# scatter-add, block-diagonal batching, padding, bf16 casts, pallas_call.
# ---------------------------------------------------------------------------
def _pad2(w, rows, cols, dtype):
    out = jnp.zeros((rows, cols), dtype)
    return out.at[: w.shape[0], : w.shape[1]].set(w.astype(dtype))


def _graph_mats(params, x, edge_index, edge_attr, mask_node_indices, Np, Hp):
    """Per-graph preprocessing (f32): padded x, exact adjacency counts A
    (keep-mask folded into columns), inv_deg, e_agg = (A@eemb)/deg."""
    N, H = x.shape
    loop = jnp.arange(N, dtype=edge_index.dtype)
    ei = jnp.concatenate([edge_index, jnp.stack([loop, loop])], axis=1)   # (2, E+N)
    sl = jnp.zeros((N, 2), dtype=edge_attr.dtype).at[:, 0].set(4)
    ea = jnp.concatenate([edge_attr, sl], axis=0)                         # (E+N, 2)
    eemb = (
        params["edge_emb1"][ea[:, 0]] + params["edge_emb2"][ea[:, 1]]
    ).astype(jnp.float32)                                                 # (E+N, H)

    src, dst = ei[0], ei[1]
    deg = jnp.zeros((N,), jnp.float32).at[dst].add(1.0)                   # >= 1 (self loops)
    A = jnp.zeros((N, N), jnp.float32).at[dst, src].add(1.0)              # exact counts
    e_agg = jnp.zeros((N, H), jnp.float32).at[dst].add(eemb) / deg[:, None]

    # x[mask_node_indices] = 0 (applied after enc_to_dec in the reference) is
    # equivalent to zeroing those source columns of A.
    keep = jnp.ones((N,), jnp.float32).at[mask_node_indices].set(0.0)
    A = A * keep[None, :]
    inv_deg = 1.0 / deg

    x_p = jnp.zeros((Np, Hp), jnp.float32).at[:N, :H].set(x.astype(jnp.float32))
    A_p = jnp.zeros((Np, Np), jnp.float32).at[:N, :N].set(A)
    i_p = jnp.zeros((Np, 1), jnp.float32).at[:N, 0].set(inv_deg)          # pad rows -> 0
    e_p = jnp.zeros((Np, Hp), jnp.float32).at[:N, :H].set(e_agg)
    return x_p, A_p, i_p, e_p


def _choose_gb(G, Np, max_rows=512):
    """Largest divisor Gb of G with Gb*Np <= max_rows, preferring G//Gb >= 2
    (keeps both v7x TensorCores busy)."""
    divs = [d for d in range(1, G + 1) if G % d == 0 and d * Np <= max_rows]
    if not divs:
        return 1
    pref = [d for d in divs if G // d >= 2]
    return max(pref) if pref else max(divs)


def _vmem_budget(R, Hp, Mp, Op):
    """Double-buffered block footprint (bytes) + margin, capped for v7x."""
    f32, b16 = 4, 2
    per_step = (
        R * Hp * b16            # x
        + R * R * b16           # P (block-diagonal)
        + R * LANE * f32        # inv_deg (lane-padded)
        + R * Hp * f32          # e_agg
        + R * Op * b16          # out
    )
    weights = (Hp * Hp + Hp * Mp + Mp * Hp + Hp * Op) * b16 \
        + 8 * (Mp + Hp + Op) * f32
    total = 2 * per_step + 2 * weights
    total = int(total * 1.5) + (1 << 20)        # compiler scratch / slack
    return max(2 << 20, min(total, 48 << 20))   # <= 48 MiB (v7x-safe)


def gnn_decoder_forward(params, x, edge_index, edge_attr, mask_node_indices):
    """Batched forward.  x: (G,N,H)  edge_index: (G,2,E)  edge_attr: (G,E,2)
    mask_node_indices: (G,M).  Returns (G,N,O) float32."""
    G, N, H = x.shape
    O = params["W_out"].shape[1]
    Hmid = params["W1"].shape[1]

    Np = max(16, -(-N // 16) * 16)       # bf16 sublane tile
    Hp = -(-H // LANE) * LANE
    Mp = -(-Hmid // LANE) * LANE
    Op = -(-O // LANE) * LANE

    Gb = _choose_gb(G, Np)               # graphs per grid step
    NB = G // Gb                         # grid length
    R = Gb * Np                          # MXU rows per step

    xp, Ap, Ip, Ep = jax.vmap(
        lambda xg, eig, eag, mg: _graph_mats(params, xg, eig, eag, mg, Np, Hp)
    )(x, edge_index, edge_attr, mask_node_indices)

    bf16 = jnp.bfloat16

    # Block-diagonal adjacency per batch of Gb graphs (exact small-integer
    # counts -> exact in bf16).
    Ab = Ap.reshape(NB, Gb, Np, Np)
    eye = jnp.eye(Gb, dtype=jnp.float32)
    Pbd = jnp.einsum("bgij,gh->bgihj", Ab, eye).reshape(NB, R, R).astype(bf16)

    xb = xp.reshape(NB, R, Hp).astype(bf16)
    Ib = Ip.reshape(NB, R, 1)
    Eb = Ep.reshape(NB, R, Hp)

    a = params["prelu_a"].reshape(1, 1).astype(jnp.float32)
    wenc = _pad2(params["W_enc"], Hp, Hp, bf16)
    w1 = _pad2(params["W1"], Hp, Mp, bf16)
    b1 = _pad2(params["b1"].reshape(1, -1), 1, Mp, jnp.float32)
    w2 = _pad2(params["W2"], Mp, Hp, bf16)
    b2 = _pad2(params["b2"].reshape(1, -1), 1, Hp, jnp.float32)
    wout = _pad2(params["W_out"], Hp, Op, bf16)
    bout = _pad2(params["b_out"].reshape(1, -1), 1, Op, jnp.float32)

    out = pl.pallas_call(
        gnn_decoder_kernel,
        out_shape=jax.ShapeDtypeStruct((NB, R, Op), bf16),
        grid=(NB,),
        in_specs=[
            pl.BlockSpec(memory_space=pltpu.MemorySpace.SMEM),      # prelu slope
            pl.BlockSpec((1, R, Hp), lambda b: (b, 0, 0)),          # x (bf16)
            pl.BlockSpec((1, R, R), lambda b: (b, 0, 0)),           # block-diag A (bf16)
            pl.BlockSpec((1, R, 1), lambda b: (b, 0, 0)),           # inv_deg (f32)
            pl.BlockSpec((1, R, Hp), lambda b: (b, 0, 0)),          # e_agg (f32)
            pl.BlockSpec((Hp, Hp), lambda b: (0, 0)),               # W_enc
            pl.BlockSpec((Hp, Mp), lambda b: (0, 0)),               # W1
            pl.BlockSpec((1, Mp), lambda b: (0, 0)),                # b1
            pl.BlockSpec((Mp, Hp), lambda b: (0, 0)),               # W2
            pl.BlockSpec((1, Hp), lambda b: (0, 0)),                # b2
            pl.BlockSpec((Hp, Op), lambda b: (0, 0)),               # W_out
            pl.BlockSpec((1, Op), lambda b: (0, 0)),                # b_out
        ],
        out_specs=pl.BlockSpec((1, R, Op), lambda b: (b, 0, 0)),
        compiler_params=pltpu.CompilerParams(
            dimension_semantics=("parallel",),
            vmem_limit_bytes=_vmem_budget(R, Hp, Mp, Op),
        ),
    )(a, xb, Pbd, Ib, Eb, wenc, w1, b1, w2, b2, wout, bout)

    # (NB, Gb*Np, Op) -> (G, Np, Op) -> strip padding, upcast.
    out = out.astype(jnp.float32).reshape(G, Np, Op)[:, :N, :O]
    return out


# ---------------------------------------------------------------------------
# Pure-JAX reference (mirrors the PyTorch forward, single graph, f32).
# ---------------------------------------------------------------------------
def gnn_decoder_reference(params, x, edge_index, edge_attr, mask_node_indices):
    N, H = x.shape
    a = params["prelu_a"]
    x = jnp.where(x > 0, x, a * x)
    x = x @ params["W_enc"]
    x = x.at[mask_node_indices].set(0.0)

    loop = jnp.arange(N, dtype=edge_index.dtype)
    ei = jnp.concatenate([edge_index, jnp.stack([loop, loop])], axis=1)
    sl = jnp.zeros((N, 2), dtype=edge_attr.dtype).at[:, 0].set(4)
    ea = jnp.concatenate([edge_attr, sl], axis=0)
    eemb = params["edge_emb1"][ea[:, 0]] + params["edge_emb2"][ea[:, 1]]

    msg = x[ei[0]] + eemb
    summed = jnp.zeros((N, H), jnp.float32).at[ei[1]].add(msg)
    cnt = jnp.zeros((N,), jnp.float32).at[ei[1]].add(1.0)
    agg = summed / cnt[:, None]

    h = jnp.maximum(agg @ params["W1"] + params["b1"], 0.0)
    h = h @ params["W2"] + params["b2"]
    return h @ params["W_out"] + params["b_out"]


def make_params(key, hidden_dim, out_dim):
    ks = jax.random.split(key, 8)
    f32 = jnp.float32
    scale = 0.1
    return {
        "prelu_a": jnp.asarray(0.25, f32),  # PReLU default init
        "W_enc": scale * jax.random.normal(ks[0], (hidden_dim, hidden_dim), f32),
        "edge_emb1": scale * jax.random.normal(ks[1], (NUM_BOND_TYPE, hidden_dim), f32),
        "edge_emb2": scale * jax.random.normal(ks[2], (NUM_BOND_DIRECTION, hidden_dim), f32),
        "W1": scale * jax.random.normal(ks[3], (hidden_dim, 2 * hidden_dim), f32),
        "b1": jnp.zeros((2 * hidden_dim,), f32),
        "W2": scale * jax.random.normal(ks[4], (2 * hidden_dim, hidden_dim), f32),
        "b2": jnp.zeros((hidden_dim,), f32),
        "W_out": scale * jax.random.normal(ks[5], (hidden_dim, out_dim), f32),
        "b_out": scale * jax.random.normal(ks[6], (out_dim,), f32),
        # dec_token (torch Parameter) is unused in forward -> omitted.
    }


if __name__ == "__main__":
    key = jax.random.PRNGKey(0)
    k_param, k_data = jax.random.split(key)

    G, N, H, O, E = 16, 8, 32, 16, 12
    params = make_params(k_param, H, O)

    ks = jax.random.split(k_data, 5)
    x = jax.random.normal(ks[0], (G, N, H), jnp.float32)
    src = jax.random.randint(ks[1], (G, E), 0, N, jnp.int32)
    dst = jax.random.randint(ks[2], (G, E), 0, N, jnp.int32)
    edge_index = jnp.stack([src, dst], axis=1)                       # (G, 2, E)
    edge_attr = jnp.stack(
        [
            jax.random.randint(ks[3], (G, E), 0, NUM_BOND_TYPE, jnp.int32),
            jax.random.randint(ks[4], (G, E), 0, NUM_BOND_DIRECTION, jnp.int32),
        ],
        axis=-1,
    )                                                                # (G, E, 2)
    mask_node_indices = (
        jnp.tile(jnp.array([[1, 4]], jnp.int32), (G, 1)) + jnp.arange(G)[:, None]
    ) % N                                                            # (G, 2)

    out = gnn_decoder_forward(params, x, edge_index, edge_attr, mask_node_indices)
    out = jax.block_until_ready(out)

    ref = jnp.stack(
        [
            gnn_decoder_reference(
                params, x[g], edge_index[g], edge_attr[g], mask_node_indices[g]
            )
            for g in range(G)
        ]
    )
    assert out.shape == (G, N, O)
    # bf16 matmul inputs / bf16 output with f32 accumulation -> relaxed tol.
    assert jnp.allclose(out, ref, rtol=2e-2, atol=2e-2), "mismatch vs reference"

    print("KERNEL_OK")
</pallas_src>

<mosaic_0001>
module attributes {stable_mosaic.version = 11 : i64} {
  func.func @gnn_decoder_kernel(%arg0: i32, %arg1: memref<1x1xf32, #tpu.memory_space<smem>>, %arg2: memref<1x128x128xbf16, #tpu.memory_space<vmem>>, %arg3: memref<1x128x128xbf16, #tpu.memory_space<vmem>>, %arg4: memref<1x128x1xf32, #tpu.memory_space<vmem>>, %arg5: memref<1x128x128xf32, #tpu.memory_space<vmem>>, %arg6: memref<128x128xbf16, #tpu.memory_space<vmem>>, %arg7: memref<128x128xbf16, #tpu.memory_space<vmem>>, %arg8: memref<1x128xf32, #tpu.memory_space<vmem>>, %arg9: memref<128x128xbf16, #tpu.memory_space<vmem>>, %arg10: memref<1x128xf32, #tpu.memory_space<vmem>>, %arg11: memref<128x128xbf16, #tpu.memory_space<vmem>>, %arg12: memref<1x128xf32, #tpu.memory_space<vmem>>, %arg13: memref<1x128x128xbf16, #tpu.memory_space<vmem>>) attributes {dimension_semantics = [#tpu.dimension_semantics<parallel>], iteration_bounds = array<i64: 2>, scalar_prefetch = 0 : i64, scratch_operands = 0 : i64, tpu.core_type = #tpu.core_type<tc>, window_params = [{transform_indices = @transform_0, window_bounds = array<i64: 1, 1>}, {transform_indices = @transform_1, window_bounds = array<i64: 1, 128, 128>}, {transform_indices = @transform_2, window_bounds = array<i64: 1, 128, 128>}, {transform_indices = @transform_3, window_bounds = array<i64: 1, 128, 1>}, {transform_indices = @transform_4, window_bounds = array<i64: 1, 128, 128>}, {pipeline_mode = #tpu.pipeline_mode<synchronous>, transform_indices = @transform_5, window_bounds = array<i64: 128, 128>}, {pipeline_mode = #tpu.pipeline_mode<synchronous>, transform_indices = @transform_6, window_bounds = array<i64: 128, 128>}, {pipeline_mode = #tpu.pipeline_mode<synchronous>, transform_indices = @transform_7, window_bounds = array<i64: 1, 128>}, {pipeline_mode = #tpu.pipeline_mode<synchronous>, transform_indices = @transform_8, window_bounds = array<i64: 128, 128>}, {pipeline_mode = #tpu.pipeline_mode<synchronous>, transform_indices = @transform_9, window_bounds = array<i64: 1, 128>}, {pipeline_mode = #tpu.pipeline_mode<synchronous>, transform_indices = @transform_10, window_bounds = array<i64: 128, 128>}, {pipeline_mode = #tpu.pipeline_mode<synchronous>, transform_indices = @transform_11, window_bounds = array<i64: 1, 128>}, {transform_indices = @transform_12, window_bounds = array<i64: 1, 128, 128>}]} {
    %c0 = arith.constant 0 : index
    %c0_0 = arith.constant 0 : index
    %0 = memref.load %arg1[%c0, %c0_0] : memref<1x1xf32, #tpu.memory_space<smem>>
    %c0_1 = arith.constant 0 : index
    %c0_2 = arith.constant 0 : index
    %c0_3 = arith.constant 0 : index
    %1 = vector.load %arg2[%c0_1, %c0_2, %c0_3] : memref<1x128x128xbf16, #tpu.memory_space<vmem>>, vector<1x128x128xbf16>
    %2 = vector.shape_cast %1 : vector<1x128x128xbf16> to vector<128x128xbf16>
    %cst = arith.constant 0.000000e+00 : bf16
    %3 = vector.broadcast %cst : bf16 to vector<128x128xbf16>
    %4 = arith.cmpf ogt, %2, %3 : vector<128x128xbf16>
    %5 = arith.truncf %0 : f32 to bf16
    %6 = vector.broadcast %5 : bf16 to vector<128x128xbf16>
    %7 = arith.mulf %6, %2 : vector<128x128xbf16>
    %8 = arith.select %4, %2, %7 : vector<128x128xi1>, vector<128x128xbf16>
    %c0_4 = arith.constant 0 : index
    %c0_5 = arith.constant 0 : index
    %9 = vector.load %arg6[%c0_4, %c0_5] : memref<128x128xbf16, #tpu.memory_space<vmem>>, vector<128x128xbf16>
    %cst_6 = arith.constant dense<0.000000e+00> : vector<128x128xf32>
    %10 = tpu.matmul %8, %9, %cst_6 {dimension_numbers = #tpu.dot_dimension_numbers<[1], [0], [0], [1], [0, 0, 1, 1], [], []>} : vector<128x128xbf16>, vector<128x128xbf16>, vector<128x128xf32> -> vector<128x128xf32>
    %c0_7 = arith.constant 0 : index
    %c0_8 = arith.constant 0 : index
    %c0_9 = arith.constant 0 : index
    %11 = vector.load %arg3[%c0_7, %c0_8, %c0_9] : memref<1x128x128xbf16, #tpu.memory_space<vmem>>, vector<1x128x128xbf16>
    %12 = vector.shape_cast %11 : vector<1x128x128xbf16> to vector<128x128xbf16>
    %13 = arith.truncf %10 : vector<128x128xf32> to vector<128x128xbf16>
    %cst_10 = arith.constant dense<0.000000e+00> : vector<128x128xf32>
    %14 = tpu.matmul %12, %13, %cst_10 {dimension_numbers = #tpu.dot_dimension_numbers<[1], [0], [0], [1], [0, 0, 1, 1], [], []>} : vector<128x128xbf16>, vector<128x128xbf16>, vector<128x128xf32> -> vector<128x128xf32>
    %c0_11 = arith.constant 0 : index
    %c0_12 = arith.constant 0 : index
    %c0_13 = arith.constant 0 : index
    %15 = vector.load %arg4[%c0_11, %c0_12, %c0_13] : memref<1x128x1xf32, #tpu.memory_space<vmem>>, vector<1x128x1xf32>
    %16 = vector.shape_cast %15 : vector<1x128x1xf32> to vector<128x1xf32>
    %17 = vector.broadcast %16 : vector<128x1xf32> to vector<128x128xf32>
    %18 = arith.mulf %14, %17 : vector<128x128xf32>
    %c0_14 = arith.constant 0 : index
    %c0_15 = arith.constant 0 : index
    %c0_16 = arith.constant 0 : index
    %19 = vector.load %arg5[%c0_14, %c0_15, %c0_16] : memref<1x128x128xf32, #tpu.memory_space<vmem>>, vector<1x128x128xf32>
    %20 = vector.shape_cast %19 : vector<1x128x128xf32> to vector<128x128xf32>
    %21 = arith.addf %18, %20 : vector<128x128xf32>
    %22 = arith.truncf %21 : vector<128x128xf32> to vector<128x128xbf16>
    %c0_17 = arith.constant 0 : index
    %c0_18 = arith.constant 0 : index
    %23 = vector.load %arg7[%c0_17, %c0_18] : memref<128x128xbf16, #tpu.memory_space<vmem>>, vector<128x128xbf16>
    %cst_19 = arith.constant dense<0.000000e+00> : vector<128x128xf32>
    %24 = tpu.matmul %22, %23, %cst_19 {dimension_numbers = #tpu.dot_dimension_numbers<[1], [0], [0], [1], [0, 0, 1, 1], [], []>} : vector<128x128xbf16>, vector<128x128xbf16>, vector<128x128xf32> -> vector<128x128xf32>
    %c0_20 = arith.constant 0 : index
    %c0_21 = arith.constant 0 : index
    %25 = vector.load %arg8[%c0_20, %c0_21] : memref<1x128xf32, #tpu.memory_space<vmem>>, vector<1x128xf32>
    %26 = vector.broadcast %25 : vector<1x128xf32> to vector<128x128xf32>
    %27 = arith.addf %24, %26 : vector<128x128xf32>
    %cst_22 = arith.constant 0.000000e+00 : f32
    %28 = vector.broadcast %cst_22 : f32 to vector<128x128xf32>
    %29 = arith.maximumf %27, %28 : vector<128x128xf32>
    %30 = arith.truncf %29 : vector<128x128xf32> to vector<128x128xbf16>
    %c0_23 = arith.constant 0 : index
    %c0_24 = arith.constant 0 : index
    %31 = vector.load %arg9[%c0_23, %c0_24] : memref<128x128xbf16, #tpu.memory_space<vmem>>, vector<128x128xbf16>
    %cst_25 = arith.constant dense<0.000000e+00> : vector<128x128xf32>
    %32 = tpu.matmul %30, %31, %cst_25 {dimension_numbers = #tpu.dot_dimension_numbers<[1], [0], [0], [1], [0, 0, 1, 1], [], []>} : vector<128x128xbf16>, vector<128x128xbf16>, vector<128x128xf32> -> vector<128x128xf32>
    %c0_26 = arith.constant 0 : index
    %c0_27 = arith.constant 0 : index
    %33 = vector.load %arg10[%c0_26, %c0_27] : memref<1x128xf32, #tpu.memory_space<vmem>>, vector<1x128xf32>
    %34 = vector.broadcast %33 : vector<1x128xf32> to vector<128x128xf32>
    %35 = arith.addf %32, %34 : vector<128x128xf32>
    %36 = arith.truncf %35 : vector<128x128xf32> to vector<128x128xbf16>
    %c0_28 = arith.constant 0 : index
    %c0_29 = arith.constant 0 : index
    %37 = vector.load %arg11[%c0_28, %c0_29] : memref<128x128xbf16, #tpu.memory_space<vmem>>, vector<128x128xbf16>
    %cst_30 = arith.constant dense<0.000000e+00> : vector<128x128xf32>
    %38 = tpu.matmul %36, %37, %cst_30 {dimension_numbers = #tpu.dot_dimension_numbers<[1], [0], [0], [1], [0, 0, 1, 1], [], []>} : vector<128x128xbf16>, vector<128x128xbf16>, vector<128x128xf32> -> vector<128x128xf32>
    %c0_31 = arith.constant 0 : index
    %c0_32 = arith.constant 0 : index
    %39 = vector.load %arg12[%c0_31, %c0_32] : memref<1x128xf32, #tpu.memory_space<vmem>>, vector<1x128xf32>
    %40 = vector.broadcast %39 : vector<1x128xf32> to vector<128x128xf32>
    %41 = arith.addf %38, %40 : vector<128x128xf32>
    %42 = arith.truncf %41 : vector<128x128xf32> to vector<128x128xbf16>
    %c0_33 = arith.constant 0 : index
    %c0_34 = arith.constant 0 : index
    %c0_35 = arith.constant 0 : index
    %43 = vector.load %arg13[%c0_33, %c0_34, %c0_35] : memref<1x128x128xbf16, #tpu.memory_space<vmem>>, vector<1x128x128xbf16>
    %44 = vector.shape_cast %43 : vector<1x128x128xbf16> to vector<128x128xbf16>
    %45 = vector.shape_cast %42 : vector<128x128xbf16> to vector<1x128x128xbf16>
    tpu.vector_store %arg13[%c0_33, %c0_34, %c0_35], %45 {strides = array<i32>} : memref<1x128x128xbf16, #tpu.memory_space<vmem>>, vector<1x128x128xbf16>,
    return
  }
  func.func @transform_0(%arg0: i32) -> (i32, i32) {
    %c0_i32 = arith.constant 0 : i32
    %c0_i32_0 = arith.constant 0 : i32
    %c0_i32_1 = arith.constant 0 : i32
    return %c0_i32, %c0_i32_0 : i32, i32
  }
  func.func @transform_1(%arg0: i32) -> (i32, i32, i32) {
    %c0_i32 = arith.constant 0 : i32
    %c0_i32_0 = arith.constant 0 : i32
    %c0_i32_1 = arith.constant 0 : i32
    return %arg0, %c0_i32, %c0_i32_0 : i32, i32, i32
  }
  func.func @transform_2(%arg0: i32) -> (i32, i32, i32) {
    %c0_i32 = arith.constant 0 : i32
    %c0_i32_0 = arith.constant 0 : i32
    %c0_i32_1 = arith.constant 0 : i32
    return %arg0, %c0_i32, %c0_i32_0 : i32, i32, i32
  }
  func.func @transform_3(%arg0: i32) -> (i32, i32, i32) {
    %c0_i32 = arith.constant 0 : i32
    %c0_i32_0 = arith.constant 0 : i32
    %c0_i32_1 = arith.constant 0 : i32
    return %arg0, %c0_i32, %c0_i32_0 : i32, i32, i32
  }
  func.func @transform_4(%arg0: i32) -> (i32, i32, i32) {
    %c0_i32 = arith.constant 0 : i32
    %c0_i32_0 = arith.constant 0 : i32
    %c0_i32_1 = arith.constant 0 : i32
    return %arg0, %c0_i32, %c0_i32_0 : i32, i32, i32
  }
  func.func @transform_5(%arg0: i32) -> (i32, i32) {
    %c0_i32 = arith.constant 0 : i32
    %c0_i32_0 = arith.constant 0 : i32
    %c0_i32_1 = arith.constant 0 : i32
    return %c0_i32, %c0_i32_0 : i32, i32
  }
  func.func @transform_6(%arg0: i32) -> (i32, i32) {
    %c0_i32 = arith.constant 0 : i32
    %c0_i32_0 = arith.constant 0 : i32
    %c0_i32_1 = arith.constant 0 : i32
    return %c0_i32, %c0_i32_0 : i32, i32
  }
  func.func @transform_7(%arg0: i32) -> (i32, i32) {
    %c0_i32 = arith.constant 0 : i32
    %c0_i32_0 = arith.constant 0 : i32
    %c0_i32_1 = arith.constant 0 : i32
    return %c0_i32, %c0_i32_0 : i32, i32
  }
  func.func @transform_8(%arg0: i32) -> (i32, i32) {
    %c0_i32 = arith.constant 0 : i32
    %c0_i32_0 = arith.constant 0 : i32
    %c0_i32_1 = arith.constant 0 : i32
    return %c0_i32, %c0_i32_0 : i32, i32
  }
  func.func @transform_9(%arg0: i32) -> (i32, i32) {
    %c0_i32 = arith.constant 0 : i32
    %c0_i32_0 = arith.constant 0 : i32
    %c0_i32_1 = arith.constant 0 : i32
    return %c0_i32, %c0_i32_0 : i32, i32
  }
  func.func @transform_10(%arg0: i32) -> (i32, i32) {
    %c0_i32 = arith.constant 0 : i32
    %c0_i32_0 = arith.constant 0 : i32
    %c0_i32_1 = arith.constant 0 : i32
    return %c0_i32, %c0_i32_0 : i32, i32
  }
  func.func @transform_11(%arg0: i32) -> (i32, i32) {
    %c0_i32 = arith.constant 0 : i32
    %c0_i32_0 = arith.constant 0 : i32
    %c0_i32_1 = arith.constant 0 : i32
    return %c0_i32, %c0_i32_0 : i32, i32
  }
  func.func @transform_12(%arg0: i32) -> (i32, i32, i32) {
    %c0_i32 = arith.constant 0 : i32
    %c0_i32_0 = arith.constant 0 : i32
    %c0_i32_1 = arith.constant 0 : i32
    return %arg0, %c0_i32, %c0_i32_0 : i32, i32, i32
  }
}

</mosaic_0001>

<llo_original>
// kernel: tpu_custom_call.1
$region0: #{tpu_custom_call.1}
  #allocation0 [shape = 'u32[]', space=smem, size = 0x4, offset = 0x4, fixed_abs, tag = 'smem constant byte address 0x4 - core index']
  #allocation1 [shape = 'u32[144,128]{1,0:T(1,128)}', space=vmem, size = 0x12000, scoped, tag = 'internal scratch']
  #allocation2 [shape = 'f32[1,1]{1,0:T(1,128)S(6)}', space=smem, size = 0x200, scoped, tag = 'scoped memory for tpu_custom_call.1']
  %s0 = inlined_call_operand.<no memory space> [shape: f32[1,1], index: 0, kind: input, shape index: {}]
  %s1 = inlined_call_operand.hbm [shape: bf16[2,128,128], index: 1, kind: input, shape index: {}]
  %s2 = inlined_call_operand.hbm [shape: bf16[2,128,128], index: 2, kind: input, shape index: {}]
  %s3 = inlined_call_operand.vmem [shape: f32[2,128,1], index: 3, kind: input, shape index: {}]
  %s4 = inlined_call_operand.vmem [shape: f32[2,128,128], index: 4, kind: input, shape index: {}]
  %s5 = inlined_call_operand.hbm [shape: bf16[128,128], index: 5, kind: input, shape index: {}]
  %s6 = inlined_call_operand.hbm [shape: bf16[128,128], index: 6, kind: input, shape index: {}]
  %s7 = inlined_call_operand.vmem [shape: f32[1,128], index: 7, kind: input, shape index: {}]
  %s8 = inlined_call_operand.hbm [shape: bf16[128,128], index: 8, kind: input, shape index: {}]
  %s9 = inlined_call_operand.vmem [shape: f32[1,128], index: 9, kind: input, shape index: {}]
  %s10 = inlined_call_operand.hbm [shape: bf16[128,128], index: 10, kind: input, shape index: {}]
  %s11 = inlined_call_operand.vmem [shape: f32[1,128], index: 11, kind: input, shape index: {}]
  %s12 = inlined_call_operand.hbm [shape: bf16[2,128,128], index: 12, kind: output, shape index: {}]
  %s13 = sld [smem:[#allocation0]]
  $region105: #{tpu_custom_call.1} parent=0
    _
  %s15 = ssub.s32 1, %s13
  %s16 = scalar_select 0, %s15, %s13
  %17 = sst [smem:[#allocation2]] %s0
  $region1: #{tpu_custom_call.1} parent=0
    #allocation3 [shape = 'u8[65536]{0}', space=vmem, size = 0x10000, scoped, tag = 'input window, operand 1']
    #allocation4 [shape = 's32[2]{0}', space=sflag, size = 0x8, scoped, tag = 'scoped memory for tpu_custom_call.1']
    #allocation5 [shape = 's32[2]{0}', space=sflag, size = 0x8, scoped, tag = 'scoped memory for tpu_custom_call.1']
    #allocation6 [shape = 'u8[65536]{0}', space=vmem, size = 0x10000, scoped, tag = 'input window, operand 2']
    #allocation7 [shape = 's32[2]{0}', space=sflag, size = 0x8, scoped, tag = 'scoped memory for tpu_custom_call.1']
    #allocation8 [shape = 'u8[32768]{0}', space=vmem, size = 0x8000, scoped, tag = 'input window, operand 5, single buffered']
    #allocation9 [shape = 'u8[32768]{0}', space=vmem, size = 0x8000, scoped, tag = 'input window, operand 6, single buffered']
    #allocation10 [shape = 's32[1]{0}', space=sflag, size = 0x4, scoped, tag = 'scoped memory for tpu_custom_call.1']
    #allocation11 [shape = 'u8[32768]{0}', space=vmem, size = 0x8000, scoped, tag = 'input window, operand 8, single buffered']
    #allocation12 [shape = 'u8[32768]{0}', space=vmem, size = 0x8000, scoped, tag = 'input window, operand 10, single buffered']
    #allocation13 [shape = 's32[1]{0}', space=sflag, size = 0x4, scoped, tag = 'scoped memory for tpu_custom_call.1']
    #allocation14 [shape = 'u8[65536]{0}', space=vmem, size = 0x10000, scoped, tag = 'output window, operand 0']
    %18 = vsyncpa [#allocation4], 0
    %s19 = scalar_lea.sflag [#allocation4], 1
    %20 = vsyncpa %s19, 0
    %21 = vsyncpa [#allocation7], 0
    %s22 = scalar_lea.sflag [#allocation7], 1
    %23 = vsyncpa %s22, 0
    %24 = vsyncpa [#allocation10], 0
    %25 = vsyncpa [#allocation13], 0
    %26 = vsyncpa [#allocation5], 0
    %s27 = scalar_lea.sflag [#allocation5], 1
    %28 = vsyncpa %s27, 0
    loop: start=0, step=1, limit=4
    $region2: #{tpu_custom_call.1} parent=1 // loop_pre_header
      _
    $region3: #{tpu_custom_call.1} parent=1 // loop_header
      %s30 = sphi 0, %s34
      %p31 = scmp.ge.s32.totalorder %s30, 4
      %s38 = sphi 0, %s38
      %s40 = sphi 0, %s38
      %s41 = sphi 0, %s40
      %s55 = sphi 0, %s41
      %s61 = sphi 0, %s63
      %s64 = sphi 0, %s61
      %s65 = sphi 0, %s64
      %s81 = sphi 0, %s65
      %s87 = sphi 0, %s89
      %s90 = sphi 0, %s87
      %s91 = sphi 0, %s90
      %s107 = sphi 0, %s91
      %s113 = sphi 0, %s115
      %s116 = sphi 0, %s113
      %s117 = sphi 0, %s116
      %s133 = sphi 0, %s117
      %s139 = sphi 0, %s141
      %s142 = sphi 0, %s139
      %s143 = sphi 0, %s142
      %s159 = sphi 0, %s143
      %s163 = sphi 0, %s163
      %s165 = sphi 0, %s163
      %s166 = sphi 0, %s165
      %s180 = sphi 0, %s166
      %s184 = sphi 0, %s184
      %s186 = sphi 0, %s184
      %s187 = sphi 0, %s186
      %s201 = sphi 0, %s187
      %s205 = sphi 0, %s205
      %s207 = sphi 0, %s205
      %s208 = sphi 0, %s207
      %s222 = sphi 0, %s208
      %s226 = sphi 0, %s226
      %s228 = sphi 0, %s226
      %s229 = sphi 0, %s228
      %s243 = sphi 0, %s229
      %s247 = sphi 0, %s247
      %s249 = sphi 0, %s247
      %s250 = sphi 0, %s249
      %s264 = sphi 0, %s250
      %s268 = sphi 0, %s268
      %s270 = sphi 0, %s268
      %s271 = sphi 0, %s270
      %s285 = sphi 0, %s271
      %s289 = sphi 0, %s289
      %s291 = sphi 0, %s289
      %s292 = sphi 0, %s291
      %s306 = sphi 0, %s292
      %s312 = sphi 0, %s314
      %s315 = sphi 0, %s312
      %s316 = sphi 0, %s315
      %s332 = sphi 0, %s316
    $region4: #{tpu_custom_call.1} parent=1 // loop_header_branch
      %33 = sbr.rel (%p31) target = $region8
    $region5: #{tpu_custom_call.1} parent=1 // loop_body
      %s35 = ssub.s32 %s30, 1
      %s36 = ssub.s32 %s30, 2
      %s37 = sadd.s32 %s30, 1
      %s39 = sadd.s32 %s38, 1
      %p42 = scmp.eq.s32.totalorder %s30, 1
      %p43 = scmp.ne.s32.totalorder %s38, %s40
      %p44 = scmp.eq.s32.totalorder %s30, 0
      %p45 = por %p43, %p44
      %p46 = scmp.ne.s32.totalorder %s38, %s40
      %p47 = scmp.eq.s32.totalorder %s35, 1
      %p48 = por %p46, %p47
      %p49 = scmp.ne.s32.totalorder %s40, %s41
      %p50 = scmp.eq.s32.totalorder %s35, 0
      %p51 = por %p49, %p50
      %p52 = scmp.ne.s32.totalorder %s40, %s41
      %p53 = scmp.eq.s32.totalorder %s36, 1
      %p54 = por %p52, %p53
      %p56 = scmp.ne.s32.totalorder %s41, %s55
      %p57 = scmp.eq.s32.totalorder %s36, 0
      %p58 = por %p56, %p57
      %s59 = ssub.s32 %s30, %s37
      %p60 = scmp.eq.s32.totalorder %s59, 0
      %s62 = sadd.s32 %s61, 1
      %s63 = scalar_select %p60, %s61, %s62
      %p66 = pneg %p60
      %p67 = scmp.eq.s32.totalorder %s30, 1
      %p68 = por %p66, %p67
      %p69 = scmp.ne.s32.totalorder %s61, %s64
      %p70 = scmp.eq.s32.totalorder %s30, 0
      %p71 = por %p69, %p70
      %p72 = scmp.ne.s32.totalorder %s61, %s64
      %p73 = scmp.eq.s32.totalorder %s35, 1
      %p74 = por %p72, %p73
      %p75 = scmp.ne.s32.totalorder %s64, %s65
      %p76 = scmp.eq.s32.totalorder %s35, 0
      %p77 = por %p75, %p76
      %p78 = scmp.ne.s32.totalorder %s64, %s65
      %p79 = scmp.eq.s32.totalorder %s36, 1
      %p80 = por %p78, %p79
      %p82 = scmp.ne.s32.totalorder %s65, %s81
      %p83 = scmp.eq.s32.totalorder %s36, 0
      %p84 = por %p82, %p83
      %s85 = ssub.s32 %s30, %s37
      %p86 = scmp.eq.s32.totalorder %s85, 0
      %s88 = sadd.s32 %s87, 1
      %s89 = scalar_select %p86, %s87, %s88
      %p92 = pneg %p86
      %p93 = scmp.eq.s32.totalorder %s30, 1
      %p94 = por %p92, %p93
      %p95 = scmp.ne.s32.totalorder %s87, %s90
      %p96 = scmp.eq.s32.totalorder %s30, 0
      %p97 = por %p95, %p96
      %p98 = scmp.ne.s32.totalorder %s87, %s90
      %p99 = scmp.eq.s32.totalorder %s35, 1
      %p100 = por %p98, %p99
      %p101 = scmp.ne.s32.totalorder %s90, %s91
      %p102 = scmp.eq.s32.totalorder %s35, 0
      %p103 = por %p101, %p102
      %p104 = scmp.ne.s32.totalorder %s90, %s91
      %p105 = scmp.eq.s32.totalorder %s36, 1
      %p106 = por %p104, %p105
      %p108 = scmp.ne.s32.totalorder %s91, %s107
      %p109 = scmp.eq.s32.totalorder %s36, 0
      %p110 = por %p108, %p109
      %s111 = ssub.s32 %s30, %s37
      %p112 = scmp.eq.s32.totalorder %s111, 0
      %s114 = sadd.s32 %s113, 1
      %s115 = scalar_select %p112, %s113, %s114
      %p118 = pneg %p112
      %p119 = scmp.eq.s32.totalorder %s30, 1
      %p120 = por %p118, %p119
      %p121 = scmp.ne.s32.totalorder %s113, %s116
      %p122 = scmp.eq.s32.totalorder %s30, 0
      %p123 = por %p121, %p122
      %p124 = scmp.ne.s32.totalorder %s113, %s116
      %p125 = scmp.eq.s32.totalorder %s35, 1
      %p126 = por %p124, %p125
      %p127 = scmp.ne.s32.totalorder %s116, %s117
      %p128 = scmp.eq.s32.totalorder %s35, 0
      %p129 = por %p127, %p128
      %p130 = scmp.ne.s32.totalorder %s116, %s117
      %p131 = scmp.eq.s32.totalorder %s36, 1
      %p132 = por %p130, %p131
      %p134 = scmp.ne.s32.totalorder %s117, %s133
      %p135 = scmp.eq.s32.totalorder %s36, 0
      %p136 = por %p134, %p135
      %s137 = ssub.s32 %s30, %s37
      %p138 = scmp.eq.s32.totalorder %s137, 0
      %s140 = sadd.s32 %s139, 1
      %s141 = scalar_select %p138, %s139, %s140
      %p144 = pneg %p138
      %p145 = scmp.eq.s32.totalorder %s30, 1
      %p146 = por %p144, %p145
      %p147 = scmp.ne.s32.totalorder %s139, %s142
      %p148 = scmp.eq.s32.totalorder %s30, 0
      %p149 = por %p147, %p148
      %p150 = scmp.ne.s32.totalorder %s139, %s142
      %p151 = scmp.eq.s32.totalorder %s35, 1
      %p152 = por %p150, %p151
      %p153 = scmp.ne.s32.totalorder %s142, %s143
      %p154 = scmp.eq.s32.totalorder %s35, 0
      %p155 = por %p153, %p154
      %p156 = scmp.ne.s32.totalorder %s142, %s143
      %p157 = scmp.eq.s32.totalorder %s36, 1
      %p158 = por %p156, %p157
      %p160 = scmp.ne.s32.totalorder %s143, %s159
      %p161 = scmp.eq.s32.totalorder %s36, 0
      %p162 = por %p160, %p161
      %s164 = sadd.s32 %s163, 1
      %p167 = scmp.eq.s32.totalorder %s30, 1
      %p168 = scmp.ne.s32.totalorder %s163, %s165
      %p169 = scmp.eq.s32.totalorder %s30, 0
      %p170 = por %p168, %p169
      %p171 = scmp.ne.s32.totalorder %s163, %s165
      %p172 = scmp.eq.s32.totalorder %s35, 1
      %p173 = por %p171, %p172
      %p174 = scmp.ne.s32.totalorder %s165, %s166
      %p175 = scmp.eq.s32.totalorder %s35, 0
      %p176 = por %p174, %p175
      %p177 = scmp.ne.s32.totalorder %s165, %s166
      %p178 = scmp.eq.s32.totalorder %s36, 1
      %p179 = por %p177, %p178
      %p181 = scmp.ne.s32.totalorder %s166, %s180
      %p182 = scmp.eq.s32.totalorder %s36, 0
      %p183 = por %p181, %p182
      %s185 = sadd.s32 %s184, 1
      %p188 = scmp.eq.s32.totalorder %s30, 1
      %p189 = scmp.ne.s32.totalorder %s184, %s186
      %p190 = scmp.eq.s32.totalorder %s30, 0
      %p191 = por %p189, %p190
      %p192 = scmp.ne.s32.totalorder %s184, %s186
      %p193 = scmp.eq.s32.totalorder %s35, 1
      %p194 = por %p192, %p193
      %p195 = scmp.ne.s32.totalorder %s186, %s187
      %p196 = scmp.eq.s32.totalorder %s35, 0
      %p197 = por %p195, %p196
      %p198 = scmp.ne.s32.totalorder %s186, %s187
      %p199 = scmp.eq.s32.totalorder %s36, 1
      %p200 = por %p198, %p199
      %p202 = scmp.ne.s32.totalorder %s187, %s201
      %p203 = scmp.eq.s32.totalorder %s36, 0
      %p204 = por %p202, %p203
      %s206 = sadd.s32 %s205, 1
      %p209 = scmp.eq.s32.totalorder %s30, 1
      %p210 = scmp.ne.s32.totalorder %s205, %s207
      %p211 = scmp.eq.s32.totalorder %s30, 0
      %p212 = por %p210, %p211
      %p213 = scmp.ne.s32.totalorder %s205, %s207
      %p214 = scmp.eq.s32.totalorder %s35, 1
      %p215 = por %p213, %p214
      %p216 = scmp.ne.s32.totalorder %s207, %s208
      %p217 = scmp.eq.s32.totalorder %s35, 0
      %p218 = por %p216, %p217
      %p219 = scmp.ne.s32.totalorder %s207, %s208
      %p220 = scmp.eq.s32.totalorder %s36, 1
      %p221 = por %p219, %p220
      %p223 = scmp.ne.s32.totalorder %s208, %s222
      %p224 = scmp.eq.s32.totalorder %s36, 0
      %p225 = por %p223, %p224
      %s227 = sadd.s32 %s226, 1
      %p230 = scmp.eq.s32.totalorder %s30, 1
      %p231 = scmp.ne.s32.totalorder %s226, %s228
      %p232 = scmp.eq.s32.totalorder %s30, 0
      %p233 = por %p231, %p232
      %p234 = scmp.ne.s32.totalorder %s226, %s228
      %p235 = scmp.eq.s32.totalorder %s35, 1
      %p236 = por %p234, %p235
      %p237 = scmp.ne.s32.totalorder %s228, %s229
      %p238 = scmp.eq.s32.totalorder %s35, 0
      %p239 = por %p237, %p238
      %p240 = scmp.ne.s32.totalorder %s228, %s229
      %p241 = scmp.eq.s32.totalorder %s36, 1
      %p242 = por %p240, %p241
      %p244 = scmp.ne.s32.totalorder %s229, %s243
      %p245 = scmp.eq.s32.totalorder %s36, 0
      %p246 = por %p244, %p245
      %s248 = sadd.s32 %s247, 1
      %p251 = scmp.eq.s32.totalorder %s30, 1
      %p252 = scmp.ne.s32.totalorder %s247, %s249
      %p253 = scmp.eq.s32.totalorder %s30, 0
      %p254 = por %p252, %p253
      %p255 = scmp.ne.s32.totalorder %s247, %s249
      %p256 = scmp.eq.s32.totalorder %s35, 1
      %p257 = por %p255, %p256
      %p258 = scmp.ne.s32.totalorder %s249, %s250
      %p259 = scmp.eq.s32.totalorder %s35, 0
      %p260 = por %p258, %p259
      %p261 = scmp.ne.s32.totalorder %s249, %s250
      %p262 = scmp.eq.s32.totalorder %s36, 1
      %p263 = por %p261, %p262
      %p265 = scmp.ne.s32.totalorder %s250, %s264
      %p266 = scmp.eq.s32.totalorder %s36, 0
      %p267 = por %p265, %p266
      %s269 = sadd.s32 %s268, 1
      %p272 = scmp.eq.s32.totalorder %s30, 1
      %p273 = scmp.ne.s32.totalorder %s268, %s270
      %p274 = scmp.eq.s32.totalorder %s30, 0
      %p275 = por %p273, %p274
      %p276 = scmp.ne.s32.totalorder %s268, %s270
      %p277 = scmp.eq.s32.totalorder %s35, 1
      %p278 = por %p276, %p277
      %p279 = scmp.ne.s32.totalorder %s270, %s271
      %p280 = scmp.eq.s32.totalorder %s35, 0
      %p281 = por %p279, %p280
      %p282 = scmp.ne.s32.totalorder %s270, %s271
      %p283 = scmp.eq.s32.totalorder %s36, 1
      %p284 = por %p282, %p283
      %p286 = scmp.ne.s32.totalorder %s271, %s285
      %p287 = scmp.eq.s32.totalorder %s36, 0
      %p288 = por %p286, %p287
      %s290 = sadd.s32 %s289, 1
      %p293 = scmp.eq.s32.totalorder %s30, 1
      %p294 = scmp.ne.s32.totalorder %s289, %s291
      %p295 = scmp.eq.s32.totalorder %s30, 0
      %p296 = por %p294, %p295
      %p297 = scmp.ne.s32.totalorder %s289, %s291
      %p298 = scmp.eq.s32.totalorder %s35, 1
      %p299 = por %p297, %p298
      %p300 = scmp.ne.s32.totalorder %s291, %s292
      %p301 = scmp.eq.s32.totalorder %s35, 0
      %p302 = por %p300, %p301
      %p303 = scmp.ne.s32.totalorder %s291, %s292
      %p304 = scmp.eq.s32.totalorder %s36, 1
      %p305 = por %p303, %p304
      %p307 = scmp.ne.s32.totalorder %s292, %s306
      %p308 = scmp.eq.s32.totalorder %s36, 0
      %p309 = por %p307, %p308
      %s310 = ssub.s32 %s30, %s37
      %p311 = scmp.eq.s32.totalorder %s310, 0
      %s313 = sadd.s32 %s312, 1
      %s314 = scalar_select %p311, %s312, %s313
      %p317 = pneg %p311
      %p318 = scmp.eq.s32.totalorder %s30, 1
      %p319 = por %p317, %p318
      %p320 = scmp.ne.s32.totalorder %s312, %s315
      %p321 = scmp.eq.s32.totalorder %s30, 0
      %p322 = por %p320, %p321
      %p323 = scmp.ne.s32.totalorder %s312, %s315
      %p324 = scmp.eq.s32.totalorder %s35, 1
      %p325 = por %p323, %p324
      %p326 = scmp.ne.s32.totalorder %s315, %s316
      %p327 = scmp.eq.s32.totalorder %s35, 0
      %p328 = por %p326, %p327
      %p329 = scmp.ne.s32.totalorder %s315, %s316
      %p330 = scmp.eq.s32.totalorder %s36, 1
      %p331 = por %p329, %p330
      %p333 = scmp.ne.s32.totalorder %s316, %s332
      %p334 = scmp.eq.s32.totalorder %s36, 0
      %p335 = por %p333, %p334
      %p336 = scmp.le.s32.totalorder 1, %s30
      %p337 = scmp.lt.s32.totalorder %s30, 3
      %p338 = pnand %p336, %p337
      %p339 = pneg %p338
      // Predicated region
      $region9: #{tpu_custom_call.1} parent=5 // pred_check
        _
      $region10: #{tpu_custom_call.1} parent=5 // pred_check_branch
        %341 = sbr.rel (%p338) target = $region12
      $region11: #{tpu_custom_call.1} parent=5 // pred_region
        %s342 = ssub.s32 %s30, 1
        // Predicated region
        $region13: #{tpu_custom_call.1} parent=11 // pred_check
          %p343 = pneg %p51
        $region14: #{tpu_custom_call.1} parent=11 // pred_check_branch
          %345 = sbr.rel (%p343) target = $region16
        $region15: #{tpu_custom_call.1} parent=11 // pred_region
          _
        $region16: #{tpu_custom_call.1} parent=11 // pred_fallthru
          _
        // Predicated region
        $region17: #{tpu_custom_call.1} parent=11 // pred_check
          %p346 = pneg %p176
        $region18: #{tpu_custom_call.1} parent=11 // pred_check_branch
          %348 = sbr.rel (%p346) target = $region20
        $region19: #{tpu_custom_call.1} parent=11 // pred_region
          %s350 = ssub.s32 1024, 1024
          %351 = vsyncadd [#allocation7], %s350
          %s352 = sshll.u32 [#allocation8], 4
          %s353 = int_to_ptr.vmem [resolvable:$true] %s352
          %358 = dma.hbm_to_vmem [thread:$0]  %s5, 1024, %s353, [#allocation7], 64, 64, 4
        $region20: #{tpu_custom_call.1} parent=11 // pred_fallthru
          _
        // Predicated region
        $region21: #{tpu_custom_call.1} parent=11 // pred_check
          %p359 = pneg %p197
        $region22: #{tpu_custom_call.1} parent=11 // pred_check_branch
          %361 = sbr.rel (%p359) target = $region24
        $region23: #{tpu_custom_call.1} parent=11 // pred_region
          %s363 = ssub.s32 1024, 1024
          %364 = vsyncadd [#allocation10], %s363
          %s365 = sshll.u32 [#allocation9], 4
          %s366 = int_to_ptr.vmem [resolvable:$true] %s365
          %371 = dma.hbm_to_vmem [thread:$0]  %s6, 1024, %s366, [#allocation10], 64, 64, 4
        $region24: #{tpu_custom_call.1} parent=11 // pred_fallthru
          _
        // Predicated region
        $region25: #{tpu_custom_call.1} parent=11 // pred_check
          %p372 = pneg %p218
        $region26: #{tpu_custom_call.1} parent=11 // pred_check_branch
          %374 = sbr.rel (%p372) target = $region28
        $region27: #{tpu_custom_call.1} parent=11 // pred_region
          _
        $region28: #{tpu_custom_call.1} parent=11 // pred_fallthru
          _
        // Predicated region
        $region29: #{tpu_custom_call.1} parent=11 // pred_check
          %p375 = pneg %p239
        $region30: #{tpu_custom_call.1} parent=11 // pred_check_branch
          %377 = sbr.rel (%p375) target = $region32
        $region31: #{tpu_custom_call.1} parent=11 // pred_region
          %s379 = ssub.s32 1024, 1024
          %380 = vsyncadd [#allocation10], %s379
          %s381 = sshll.u32 [#allocation11], 4
          %s382 = int_to_ptr.vmem [resolvable:$true] %s381
          %387 = dma.hbm_to_vmem [thread:$0]  %s8, 1024, %s382, [#allocation10], 64, 64, 4
        $region32: #{tpu_custom_call.1} parent=11 // pred_fallthru
          _
        // Predicated region
        $region33: #{tpu_custom_call.1} parent=11 // pred_check
          %p388 = pneg %p260
        $region34: #{tpu_custom_call.1} parent=11 // pred_check_branch
          %390 = sbr.rel (%p388) target = $region36
        $region35: #{tpu_custom_call.1} parent=11 // pred_region
          _
        $region36: #{tpu_custom_call.1} parent=11 // pred_fallthru
          _
        // Predicated region
        $region37: #{tpu_custom_call.1} parent=11 // pred_check
          %p391 = pneg %p281
        $region38: #{tpu_custom_call.1} parent=11 // pred_check_branch
          %393 = sbr.rel (%p391) target = $region40
        $region39: #{tpu_custom_call.1} parent=11 // pred_region
          %s395 = ssub.s32 1024, 1024
          %396 = vsyncadd [#allocation13], %s395
          %s397 = sshll.u32 [#allocation12], 4
          %s398 = int_to_ptr.vmem [resolvable:$true] %s397
          %403 = dma.hbm_to_vmem [thread:$0]  %s10, 1024, %s398, [#allocation13], 64, 64, 4
        $region40: #{tpu_custom_call.1} parent=11 // pred_fallthru
          _
        // Predicated region
        $region41: #{tpu_custom_call.1} parent=11 // pred_check
          %p404 = pneg %p302
        $region42: #{tpu_custom_call.1} parent=11 // pred_check_branch
          %406 = sbr.rel (%p404) target = $region44
        $region43: #{tpu_custom_call.1} parent=11 // pred_region
          _
        $region44: #{tpu_custom_call.1} parent=11 // pred_fallthru
          _
      $region12: #{tpu_custom_call.1} parent=5 // pred_fallthru
        _
      %p407 = scmp.lt.s32.totalorder %s30, 2
      // Predicated region
      $region45: #{tpu_custom_call.1} parent=5 // pred_check
        %p408 = pneg %p407
      $region46: #{tpu_custom_call.1} parent=5 // pred_check_branch
        %410 = sbr.rel (%p408) target = $region48
      $region47: #{tpu_custom_call.1} parent=5 // pred_region
        // Predicated region
        $region49: #{tpu_custom_call.1} parent=47 // pred_check
          %p411 = pneg %p71
        $region50: #{tpu_custom_call.1} parent=47 // pred_check_branch
          %413 = sbr.rel (%p411) target = $region52
        $region51: #{tpu_custom_call.1} parent=47 // pred_region
          %s414 = sand.u32 %s61, 1
          %s415 = scalar_lea.sflag [#allocation4], %s414
          %s416 = sand.u32 %s61, 1
          %s417 = smul.addr %s416, 64
          %s418 = scalar_lea.vmem [#allocation3], %s417
          %s420 = ssub.s32 1024, 1024
          %421 = vsyncadd %s415, %s420
          %s422 = smul.addr %s30, 16
          %s423 = smul.addr %s422, 64
          %s424 = scalar_lea.hbm %s1, %s423
          %s425 = sshll.u32 %s418, 4
          %s426 = int_to_ptr.vmem [resolvable:$true] %s425
          %431 = dma.hbm_to_vmem [thread:$0]  %s424, 1024, %s426, %s415, 64, 64, 4
        $region52: #{tpu_custom_call.1} parent=47 // pred_fallthru
          _
        // Predicated region
        $region53: #{tpu_custom_call.1} parent=47 // pred_check
          %p432 = pneg %p97
        $region54: #{tpu_custom_call.1} parent=47 // pred_check_branch
          %434 = sbr.rel (%p432) target = $region56
        $region55: #{tpu_custom_call.1} parent=47 // pred_region
          %s435 = sand.u32 %s30, 1
          %s436 = scalar_lea.sflag [#allocation7], %s435
          %s437 = sand.u32 %s87, 1
          %s438 = smul.addr %s437, 64
          %s439 = scalar_lea.vmem [#allocation6], %s438
          %s441 = ssub.s32 1024, 1024
          %442 = vsyncadd %s436, %s441
          %s443 = smul.addr %s30, 16
          %s444 = smul.addr %s443, 64
          %s445 = scalar_lea.hbm %s2, %s444
          %s446 = sshll.u32 %s439, 4
          %s447 = int_to_ptr.vmem [resolvable:$true] %s446
          %452 = dma.hbm_to_vmem [thread:$0]  %s445, 1024, %s447, %s436, 64, 64, 4
        $region56: #{tpu_custom_call.1} parent=47 // pred_fallthru
          _
        // Predicated region
        $region57: #{tpu_custom_call.1} parent=47 // pred_check
          %p453 = pneg %p123
        $region58: #{tpu_custom_call.1} parent=47 // pred_check_branch
          %455 = sbr.rel (%p453) target = $region60
        $region59: #{tpu_custom_call.1} parent=47 // pred_region
          %p456 = scmp.lt.s32.totalorder %s30, 1
          %s457 = scalar_select %p456, %s30, 1
          %s458 = smul.addr %s457, 16
          %s459 = smul.addr %s458, 8
          %s460 = scalar_lea.vmem %s3, %s459
        $region60: #{tpu_custom_call.1} parent=47 // pred_fallthru
          _
        // Predicated region
        $region61: #{tpu_custom_call.1} parent=47 // pred_check
          %p461 = pneg %p149
        $region62: #{tpu_custom_call.1} parent=47 // pred_check_branch
          %463 = sbr.rel (%p461) target = $region64
        $region63: #{tpu_custom_call.1} parent=47 // pred_region
          %p464 = scmp.lt.s32.totalorder %s30, 1
          %s465 = scalar_select %p464, %s30, 1
          %s466 = smul.addr %s465, 16
          %s467 = smul.addr %s466, 8
          %s468 = scalar_lea.vmem %s4, %s467
        $region64: #{tpu_custom_call.1} parent=47 // pred_fallthru
          _
      $region48: #{tpu_custom_call.1} parent=5 // pred_fallthru
        _
      %p469 = scmp.le.s32.totalorder 1, %s30
      %p470 = scmp.lt.s32.totalorder %s30, 3
      %p471 = pnand %p469, %p470
      %p472 = pneg %p471
      // Predicated region
      $region65: #{tpu_custom_call.1} parent=5 // pred_check
        _
      $region66: #{tpu_custom_call.1} parent=5 // pred_check_branch
        %474 = sbr.rel (%p471) target = $region68
      $region67: #{tpu_custom_call.1} parent=5 // pred_region
        %s475 = ssub.s32 %s30, 1
        %s476 = sand.u32 %s64, 1
        %s477 = scalar_lea.sflag [#allocation4], %s476
        %s478 = sand.u32 %s64, 1
        %s479 = smul.addr %s478, 64
        %s480 = scalar_lea.vmem [#allocation3], %s479
        // Predicated region
        $region69: #{tpu_custom_call.1} parent=67 // pred_check
          %p481 = pneg %p77
        $region70: #{tpu_custom_call.1} parent=67 // pred_check_branch
          %483 = sbr.rel (%p481) target = $region72
        $region71: #{tpu_custom_call.1} parent=67 // pred_region
          %484 = dma.done %s477, 1024
        $region72: #{tpu_custom_call.1} parent=67 // pred_fallthru
          _
        %s485 = sand.u32 %s35, 1
        %s486 = scalar_lea.sflag [#allocation7], %s485
        %s487 = sand.u32 %s90, 1
        %s488 = smul.addr %s487, 64
        %s489 = scalar_lea.vmem [#allocation6], %s488
        // Predicated region
        $region73: #{tpu_custom_call.1} parent=67 // pred_check
          %p490 = pneg %p103
        $region74: #{tpu_custom_call.1} parent=67 // pred_check_branch
          %492 = sbr.rel (%p490) target = $region76
        $region75: #{tpu_custom_call.1} parent=67 // pred_region
          %493 = dma.done %s486, 1024
        $region76: #{tpu_custom_call.1} parent=67 // pred_fallthru
          _
        // Predicated region
        $region77: #{tpu_custom_call.1} parent=67 // pred_check
          %p494 = pneg %p176
        $region78: #{tpu_custom_call.1} parent=67 // pred_check_branch
          %496 = sbr.rel (%p494) target = $region80
        $region79: #{tpu_custom_call.1} parent=67 // pred_region
          %497 = dma.done [#allocation7], 1024
        $region80: #{tpu_custom_call.1} parent=67 // pred_fallthru
          _
        // Predicated region
        $region81: #{tpu_custom_call.1} parent=67 // pred_check
          %p498 = pneg %p197
        $region82: #{tpu_custom_call.1} parent=67 // pred_check_branch
          %500 = sbr.rel (%p498) target = $region84
        $region83: #{tpu_custom_call.1} parent=67 // pred_region
          %501 = dma.done [#allocation10], 1024
        $region84: #{tpu_custom_call.1} parent=67 // pred_fallthru
          _
        // Predicated region
        $region85: #{tpu_custom_call.1} parent=67 // pred_check
          %p502 = pneg %p239
        $region86: #{tpu_custom_call.1} parent=67 // pred_check_branch
          %504 = sbr.rel (%p502) target = $region88
        $region87: #{tpu_custom_call.1} parent=67 // pred_region
          %505 = dma.done [#allocation10], 1024
        $region88: #{tpu_custom_call.1} parent=67 // pred_fallthru
          _
        // Predicated region
        $region89: #{tpu_custom_call.1} parent=67 // pred_check
          %p506 = pneg %p281
        $region90: #{tpu_custom_call.1} parent=67 // pred_check_branch
          %508 = sbr.rel (%p506) target = $region92
        $region91: #{tpu_custom_call.1} parent=67 // pred_region
          %509 = dma.done [#allocation13], 1024
        $region92: #{tpu_custom_call.1} parent=67 // pred_fallthru
          _
        %p510 = pneg %p51
        %p511 = pneg %p48
        %s512 = sand.u32 %s64, 1
        %s513 = scalar_lea.sflag [#allocation4], %s512
        %s514 = sand.u32 %s64, 1
        %s515 = smul.addr %s514, 64
        %s516 = scalar_lea.vmem [#allocation3], %s515
        %p517 = pneg %p77
        %p518 = pneg %p74
        %s519 = sand.u32 %s35, 1
        %s520 = scalar_lea.sflag [#allocation7], %s519
        %s521 = sand.u32 %s90, 1
        %s522 = smul.addr %s521, 64
        %s523 = scalar_lea.vmem [#allocation6], %s522
        %p524 = pneg %p103
        %p525 = pneg %p100
        %p526 = scmp.lt.s32.totalorder %s35, 1
        %s527 = scalar_select %p526, %s35, 1
        %s528 = smul.addr %s527, 16
        %s529 = smul.addr %s528, 8
        %s530 = scalar_lea.vmem %s3, %s529
        %p531 = pneg %p129
        %p532 = pneg %p126
        %p533 = scmp.lt.s32.totalorder %s35, 1
        %s534 = scalar_select %p533, %s35, 1
        %s535 = smul.addr %s534, 16
        %s536 = smul.addr %s535, 8
        %s537 = scalar_lea.vmem %s4, %s536
        %p538 = pneg %p155
        %p539 = pneg %p152
        %p540 = pneg %p176
        %p541 = pneg %p173
        %p542 = pneg %p197
        %p543 = pneg %p194
        %p544 = pneg %p218
        %p545 = pneg %p215
        %p546 = pneg %p239
        %p547 = pneg %p236
        %p548 = pneg %p260
        %p549 = pneg %p257
        %p550 = pneg %p281
        %p551 = pneg %p278
        %p552 = pneg %p302
        %p553 = pneg %p299
        %p554 = pneg %p328
        %p555 = pneg %p325
        %s556 = sand.u32 %s315, 1
        %s557 = scalar_lea.sflag [#allocation5], %s556
        %s558 = sand.u32 %s315, 1
        %s559 = smul.addr %s558, 64
        %s560 = scalar_lea.vmem [#allocation14], %s559
        %p561 = scmp.lt.s32.totalorder %s35, 1
        %s562 = scalar_select %p561, %s35, 1
        %s563 = smul.addr %s562, 16
        %s564 = smul.addr %s563, 8
        %s565 = scalar_lea.vmem %s3, %s564
        %p566 = scmp.lt.s32.totalorder %s35, 1
        %s567 = scalar_select %p566, %s35, 1
        %s568 = smul.addr %s567, 16
        %s569 = smul.addr %s568, 8
        %s570 = scalar_lea.vmem %s4, %s569
        %s572 = sld [smem:[#allocation2]]
        %v573 = vld [vmem:[%s480] sm:$0xf]
        %v574 = vld [vmem:[%s480 + $0x4] sm:$0xf]
        %v575 = vld [vmem:[%s480 + $0x8] sm:$0xf]
        %v576 = vld [vmem:[%s480 + $0xc] sm:$0xf]
        %v577 = vld [vmem:[%s480 + $0x10] sm:$0xf]
        %v578 = vld [vmem:[%s480 + $0x14] sm:$0xf]
        %v579 = vld [vmem:[%s480 + $0x18] sm:$0xf]
        %v580 = vld [vmem:[%s480 + $0x1c] sm:$0xf]
        %v581 = vld [vmem:[%s480 + $0x20] sm:$0xf]
        %v582 = vld [vmem:[%s480 + $0x24] sm:$0xf]
        %v583 = vld [vmem:[%s480 + $0x28] sm:$0xf]
        %v584 = vld [vmem:[%s480 + $0x2c] sm:$0xf]
        %v585 = vld [vmem:[%s480 + $0x30] sm:$0xf]
        %v586 = vld [vmem:[%s480 + $0x34] sm:$0xf]
        %v587 = vld [vmem:[%s480 + $0x38] sm:$0xf]
        %v588 = vld [vmem:[%s480 + $0x3c] sm:$0xf]
        %vm589 = vcmp.gt.bf16.partialorder %v573, 0
        %vm590 = vcmp.gt.bf16.partialorder %v574, 0
        %vm591 = vcmp.gt.bf16.partialorder %v575, 0
        %vm592 = vcmp.gt.bf16.partialorder %v576, 0
        %vm593 = vcmp.gt.bf16.partialorder %v577, 0
        %vm594 = vcmp.gt.bf16.partialorder %v578, 0
        %vm595 = vcmp.gt.bf16.partialorder %v579, 0
        %vm596 = vcmp.gt.bf16.partialorder %v580, 0
        %vm597 = vcmp.gt.bf16.partialorder %v581, 0
        %vm598 = vcmp.gt.bf16.partialorder %v582, 0
        %vm599 = vcmp.gt.bf16.partialorder %v583, 0
        %vm600 = vcmp.gt.bf16.partialorder %v584, 0
        %vm601 = vcmp.gt.bf16.partialorder %v585, 0
        %vm602 = vcmp.gt.bf16.partialorder %v586, 0
        %vm603 = vcmp.gt.bf16.partialorder %v587, 0
        %vm604 = vcmp.gt.bf16.partialorder %v588, 0
        %p606 = scmp.ne.f32.partialorder %s572, %s572
        %s607 = sshrl.u32 %s572, 16
        %s608 = sand.u32 %s607, 1
        %s609 = sadd.s32 32767, %s608
        %s610 = sadd.s32 %s572, %s609
        %s611 = sand.u32 %s610, 4294901760
        %s612 = scalar_select %p606, 2143289344, %s611
        %s614 = sshrl.u32 %s612, 16
        %s615 = sshll.u32 %s614, 16
        %s616 = sor.u32 %s614, %s615
        %v617 = vstv %s616
        %v619 = vmul.bf16 %v617, %v573
        %v620 = vmul.bf16 %v617, %v574
        %v621 = vmul.bf16 %v617, %v575
        %v622 = vmul.bf16 %v617, %v576
        %v623 = vmul.bf16 %v617, %v577
        %v624 = vmul.bf16 %v617, %v578
        %v625 = vmul.bf16 %v617, %v579
        %v626 = vmul.bf16 %v617, %v580
        %v627 = vmul.bf16 %v617, %v581
        %v628 = vmul.bf16 %v617, %v582
        %v629 = vmul.bf16 %v617, %v583
        %v630 = vmul.bf16 %v617, %v584
        %v631 = vmul.bf16 %v617, %v585
        %v632 = vmul.bf16 %v617, %v586
        %v633 = vmul.bf16 %v617, %v587
        %v634 = vmul.bf16 %v617, %v588
        %v635 = vsel %vm589, %v573, %v619
        %v636 = vsel %vm590, %v574, %v620
        %v637 = vsel %vm591, %v575, %v621
        %v638 = vsel %vm592, %v576, %v622
        %v639 = vsel %vm593, %v577, %v623
        %v640 = vsel %vm594, %v578, %v624
        %v641 = vsel %vm595, %v579, %v625
        %v642 = vsel %vm596, %v580, %v626
        %v643 = vsel %vm597, %v581, %v627
        %v644 = vsel %vm598, %v582, %v628
        %v645 = vsel %vm599, %v583, %v629
        %v646 = vsel %vm600, %v584, %v630
        %v647 = vsel %vm601, %v585, %v631
        %v648 = vsel %vm602, %v586, %v632
        %v649 = vsel %vm603, %v587, %v633
        %v650 = vsel %vm604, %v588, %v634
        %v651 = vld [vmem:[#allocation8] sm:$0xf]
        %v652 = vld [vmem:[#allocation8 + $0x4] sm:$0xf]
        %v653 = vld [vmem:[#allocation8 + $0x8] sm:$0xf]
        %v654 = vld [vmem:[#allocation8 + $0xc] sm:$0xf]
        %v655 = vld [vmem:[#allocation8 + $0x10] sm:$0xf]
        %v656 = vld [vmem:[#allocation8 + $0x14] sm:$0xf]
        %v657 = vld [vmem:[#allocation8 + $0x18] sm:$0xf]
        %v658 = vld [vmem:[#allocation8 + $0x1c] sm:$0xf]
        %v659 = vld [vmem:[#allocation8 + $0x20] sm:$0xf]
        %v660 = vld [vmem:[#allocation8 + $0x24] sm:$0xf]
        %v661 = vld [vmem:[#allocation8 + $0x28] sm:$0xf]
        %v662 = vld [vmem:[#allocation8 + $0x2c] sm:$0xf]
        %v663 = vld [vmem:[#allocation8 + $0x30] sm:$0xf]
        %v664 = vld [vmem:[#allocation8 + $0x34] sm:$0xf]
        %v665 = vld [vmem:[#allocation8 + $0x38] sm:$0xf]
        %v666 = vld [vmem:[#allocation8 + $0x3c] sm:$0xf]
        %v683 = vunpack.c.l.b16 %v635
        %v684 = vunpack.c.l.b16 %v636
        %v685 = vunpack.c.l.b16 %v637
        %v686 = vunpack.c.l.b16 %v638
        %v687 = vunpack.c.l.b16 %v639
        %v688 = vunpack.c.l.b16 %v640
        %v689 = vunpack.c.l.b16 %v641
        %v690 = vunpack.c.l.b16 %v642
        %v691 = vunpack.c.l.b16 %v643
        %v692 = vunpack.c.l.b16 %v644
        %v693 = vunpack.c.l.b16 %v645
        %v694 = vunpack.c.l.b16 %v646
        %v695 = vunpack.c.l.b16 %v647
        %v696 = vunpack.c.l.b16 %v648
        %v697 = vunpack.c.l.b16 %v649
        %v698 = vunpack.c.l.b16 %v650
        %v699 = vpack.c.b16 %v684, %v683
        %v700 = vpack.c.b16 %v686, %v685
        %v701 = vpack.c.b16 %v688, %v687
        %v702 = vpack.c.b16 %v690, %v689
        %v703 = vpack.c.b16 %v692, %v691
        %v704 = vpack.c.b16 %v694, %v693
        %v705 = vpack.c.b16 %v696, %v695
        %v706 = vpack.c.b16 %v698, %v697
        %v731 = vunpack.c.l.b16 %v651
        %v732 = vunpack.c.l.b16 %v652
        %v733 = vunpack.c.l.b16 %v653
        %v734 = vunpack.c.l.b16 %v654
        %v735 = vunpack.c.l.b16 %v655
        %v736 = vunpack.c.l.b16 %v656
        %v737 = vunpack.c.l.b16 %v657
        %v738 = vunpack.c.l.b16 %v658
        %v739 = vunpack.c.l.b16 %v659
        %v740 = vunpack.c.l.b16 %v660
        %v741 = vunpack.c.l.b16 %v661
        %v742 = vunpack.c.l.b16 %v662
        %v743 = vunpack.c.l.b16 %v663
        %v744 = vunpack.c.l.b16 %v664
        %v745 = vunpack.c.l.b16 %v665
        %v746 = vunpack.c.l.b16 %v666
        %v747 = vpack.c.b16 %v732, %v731
        %v748 = vpack.c.b16 %v734, %v733
        %v749 = vpack.c.b16 %v736, %v735
        %v750 = vpack.c.b16 %v738, %v737
        %v751 = vpack.c.b16 %v740, %v739
        %v752 = vpack.c.b16 %v742, %v741
        %v753 = vpack.c.b16 %v744, %v743
        %v754 = vpack.c.b16 %v746, %v745
        %763 = vmatprep.subr.bf16.mxu0 0
        %764 = vmatpush1.bf16.msra.mxu0 %v747
        %765 = vmatprep.subr.bf16.mxu0 0
        %766 = vmatpush1.bf16.msra.mxu0 %v748
        %767 = vmatprep.subr.bf16.mxu0 0
        %768 = vmatpush1.bf16.msra.mxu0 %v749
        %769 = vmatprep.subr.bf16.mxu0 0
        %770 = vmatpush1.bf16.msra.mxu0 %v750
        %771 = vmatprep.subr.bf16.mxu0 0
        %772 = vmatpush1.bf16.msra.mxu0 %v751
        %773 = vmatprep.subr.bf16.mxu0 0
        %774 = vmatpush1.bf16.msra.mxu0 %v752
        %775 = vmatprep.subr.bf16.mxu0 0
        %776 = vmatpush1.bf16.msra.mxu0 %v753
        %777 = vmatprep.subr.bf16.mxu0 0
        %778 = vmatpush1.bf16.msra.mxu0 %v754
        %779 = vmatprep.subr.bf16.mxu0 0
        %780 = vmatpush1.bf16.msra.mxu0 0
        %781 = vmatprep.subr.bf16.mxu0 0
        %782 = vmatpush1.bf16.msra.mxu0 0
        %783 = vmatprep.subr.bf16.mxu0 0
        %784 = vmatpush1.bf16.msra.mxu0 0
        %785 = vmatprep.subr.bf16.mxu0 0
        %786 = vmatpush1.bf16.msra.mxu0 0
        %787 = vmatprep.subr.bf16.mxu0 0
        %788 = vmatpush1.bf16.msra.mxu0 0
        %789 = vmatprep.subr.bf16.mxu0 0
        %790 = vmatpush1.bf16.msra.mxu0 0
        %791 = vmatprep.subr.bf16.mxu0 0
        %792 = vmatpush1.bf16.msra.mxu0 0
        %793 = vmatprep.subr.bf16.mxu0 0
        %794 = vmatpush1.bf16.msra.mxu0 0
        %795 = vmatprep.mubr.bf16.mxu0 0
        %796 = vmatmul.mubr.bf16.gmra.mrb[0].mxu0 %v699
        %v797 = vpop.f32.mrb[0].mxu0
        %v798 = vadd.f32 0.0, %v797
        %v799 = vpop.f32.mrb[0].mxu0
        %v800 = vpop.f32.mrb[0].mxu0
        %v801 = vadd.f32 0.0, %v800
        %v802 = vpop.f32.mrb[0].mxu0
        %803 = vmatprep.mubr.bf16.mxu0 0
        %804 = vmatmul.mubr.bf16.gmra.mrb[0].mxu0 %v700
        %v805 = vpop.f32.mrb[0].mxu0
        %v806 = vadd.f32 0.0, %v805
        %v807 = vpop.f32.mrb[0].mxu0
        %v808 = vpop.f32.mrb[0].mxu0
        %v809 = vadd.f32 0.0, %v808
        %v810 = vpop.f32.mrb[0].mxu0
        %811 = vmatprep.mubr.bf16.mxu0 0
        %812 = vmatmul.mubr.bf16.gmra.mrb[0].mxu0 %v701
        %v813 = vpop.f32.mrb[0].mxu0
        %v814 = vadd.f32 0.0, %v813
        %v815 = vpop.f32.mrb[0].mxu0
        %v816 = vpop.f32.mrb[0].mxu0
        %v817 = vadd.f32 0.0, %v816
        %v818 = vpop.f32.mrb[0].mxu0
        %819 = vmatprep.mubr.bf16.mxu0 0
        %820 = vmatmul.mubr.bf16.gmra.mrb[0].mxu0 %v702
        %v821 = vpop.f32.mrb[0].mxu0
        %v822 = vadd.f32 0.0, %v821
        %v823 = vpop.f32.mrb[0].mxu0
        %v824 = vpop.f32.mrb[0].mxu0
        %v825 = vadd.f32 0.0, %v824
        %v826 = vpop.f32.mrb[0].mxu0
        %827 = vmatprep.mubr.bf16.mxu0 0
        %828 = vmatmul.mubr.bf16.gmra.mrb[0].mxu0 %v703
        %v829 = vpop.f32.mrb[0].mxu0
        %v830 = vadd.f32 0.0, %v829
        %v831 = vpop.f32.mrb[0].mxu0
        %v832 = vpop.f32.mrb[0].mxu0
        %v833 = vadd.f32 0.0, %v832
        %v834 = vpop.f32.mrb[0].mxu0
        %835 = vmatprep.mubr.bf16.mxu0 0
        %836 = vmatmul.mubr.bf16.gmra.mrb[0].mxu0 %v704
        %v837 = vpop.f32.mrb[0].mxu0
        %v838 = vadd.f32 0.0, %v837
        %v839 = vpop.f32.mrb[0].mxu0
        %v840 = vpop.f32.mrb[0].mxu0
        %v841 = vadd.f32 0.0, %v840
        %v842 = vpop.f32.mrb[0].mxu0
        %843 = vmatprep.mubr.bf16.mxu0 0
        %844 = vmatmul.mubr.bf16.gmra.mrb[0].mxu0 %v705
        %v845 = vpop.f32.mrb[0].mxu0
        %v846 = vadd.f32 0.0, %v845
        %v847 = vpop.f32.mrb[0].mxu0
        %v848 = vpop.f32.mrb[0].mxu0
        %v849 = vadd.f32 0.0, %v848
        %v850 = vpop.f32.mrb[0].mxu0
        %851 = vmatprep.mubr.bf16.mxu0 0
        %852 = vmatmul.mubr.bf16.gmra.mrb[0].mxu0 %v706
        %v853 = vpop.f32.mrb[0].mxu0
        %v854 = vadd.f32 0.0, %v853
        %v855 = vpop.f32.mrb[0].mxu0
        %v856 = vpop.f32.mrb[0].mxu0
        %v857 = vadd.f32 0.0, %v856
        %v858 = vpop.f32.mrb[0].mxu0
        %859 = vdwg.mxu0
        %v860 = vld [vmem:[%s489] sm:$0xf]
        %v861 = vld [vmem:[%s489 + $0x4] sm:$0xf]
        %v862 = vld [vmem:[%s489 + $0x8] sm:$0xf]
        %v863 = vld [vmem:[%s489 + $0xc] sm:$0xf]
        %v864 = vld [vmem:[%s489 + $0x10] sm:$0xf]
        %v865 = vld [vmem:[%s489 + $0x14] sm:$0xf]
        %v866 = vld [vmem:[%s489 + $0x18] sm:$0xf]
        %v867 = vld [vmem:[%s489 + $0x1c] sm:$0xf]
        %v868 = vld [vmem:[%s489 + $0x20] sm:$0xf]
        %v869 = vld [vmem:[%s489 + $0x24] sm:$0xf]
        %v870 = vld [vmem:[%s489 + $0x28] sm:$0xf]
        %v871 = vld [vmem:[%s489 + $0x2c] sm:$0xf]
        %v872 = vld [vmem:[%s489 + $0x30] sm:$0xf]
        %v873 = vld [vmem:[%s489 + $0x34] sm:$0xf]
        %v874 = vld [vmem:[%s489 + $0x38] sm:$0xf]
        %v875 = vld [vmem:[%s489 + $0x3c] sm:$0xf]
        %v876 = vpack.c.bf16 %v801, %v798
        %v877 = vpack.c.bf16 %v809, %v806
        %v878 = vpack.c.bf16 %v817, %v814
        %v879 = vpack.c.bf16 %v825, %v822
        %v880 = vpack.c.bf16 %v833, %v830
        %v881 = vpack.c.bf16 %v841, %v838
        %v882 = vpack.c.bf16 %v849, %v846
        %v883 = vpack.c.bf16 %v857, %v854
        %v900 = vunpack.c.l.b16 %v860
        %v901 = vunpack.c.l.b16 %v861
        %v902 = vunpack.c.l.b16 %v862
        %v903 = vunpack.c.l.b16 %v863
        %v904 = vunpack.c.l.b16 %v864
        %v905 = vunpack.c.l.b16 %v865
        %v906 = vunpack.c.l.b16 %v866
        %v907 = vunpack.c.l.b16 %v867
        %v908 = vunpack.c.l.b16 %v868
        %v909 = vunpack.c.l.b16 %v869
        %v910 = vunpack.c.l.b16 %v870
        %v911 = vunpack.c.l.b16 %v871
        %v912 = vunpack.c.l.b16 %v872
        %v913 = vunpack.c.l.b16 %v873
        %v914 = vunpack.c.l.b16 %v874
        %v915 = vunpack.c.l.b16 %v875
        %v916 = vpack.c.b16 %v901, %v900
        %v917 = vpack.c.b16 %v903, %v902
        %v918 = vpack.c.b16 %v905, %v904
        %v919 = vpack.c.b16 %v907, %v906
        %v920 = vpack.c.b16 %v909, %v908
        %v921 = vpack.c.b16 %v911, %v910
        %v922 = vpack.c.b16 %v913, %v912
        %v923 = vpack.c.b16 %v915, %v914
        %932 = vmatprep.subr.bf16.mxu0 0
        %933 = vmatpush1.bf16.msra.mxu0 %v876
        %934 = vmatprep.subr.bf16.mxu0 0
        %935 = vmatpush1.bf16.msra.mxu0 %v877
        %936 = vmatprep.subr.bf16.mxu0 0
        %937 = vmatpush1.bf16.msra.mxu0 %v878
        %938 = vmatprep.subr.bf16.mxu0 0
        %939 = vmatpush1.bf16.msra.mxu0 %v879
        %940 = vmatprep.subr.bf16.mxu0 0
        %941 = vmatpush1.bf16.msra.mxu0 %v880
        %942 = vmatprep.subr.bf16.mxu0 0
        %943 = vmatpush1.bf16.msra.mxu0 %v881
        %944 = vmatprep.subr.bf16.mxu0 0
        %945 = vmatpush1.bf16.msra.mxu0 %v882
        %946 = vmatprep.subr.bf16.mxu0 0
        %947 = vmatpush1.bf16.msra.mxu0 %v883
        %948 = vmatprep.subr.bf16.mxu0 0
        %949 = vmatpush1.bf16.msra.mxu0 0
        %950 = vmatprep.subr.bf16.mxu0 0
        %951 = vmatpush1.bf16.msra.mxu0 0
        %952 = vmatprep.subr.bf16.mxu0 0
        %953 = vmatpush1.bf16.msra.mxu0 0
        %954 = vmatprep.subr.bf16.mxu0 0
        %955 = vmatpush1.bf16.msra.mxu0 0
        %956 = vmatprep.subr.bf16.mxu0 0
        %957 = vmatpush1.bf16.msra.mxu0 0
        %958 = vmatprep.subr.bf16.mxu0 0
        %959 = vmatpush1.bf16.msra.mxu0 0
        %960 = vmatprep.subr.bf16.mxu0 0
        %961 = vmatpush1.bf16.msra.mxu0 0
        %962 = vmatprep.subr.bf16.mxu0 0
        %963 = vmatpush1.bf16.msra.mxu0 0
        %964 = vmatprep.mubr.bf16.mxu0 0
        %965 = vmatmul.mubr.bf16.gmra.mrb[0].mxu0 %v916
        %v966 = vpop.f32.mrb[0].mxu0
        %v967 = vadd.f32 0.0, %v966
        %v968 = vpop.f32.mrb[0].mxu0
        %v969 = vpop.f32.mrb[0].mxu0
        %v970 = vadd.f32 0.0, %v969
        %v971 = vpop.f32.mrb[0].mxu0
        %972 = vmatprep.mubr.bf16.mxu0 0
        %973 = vmatmul.mubr.bf16.gmra.mrb[0].mxu0 %v917
        %v974 = vpop.f32.mrb[0].mxu0
        %v975 = vadd.f32 0.0, %v974
        %v976 = vpop.f32.mrb[0].mxu0
        %v977 = vpop.f32.mrb[0].mxu0
        %v978 = vadd.f32 0.0, %v977
        %v979 = vpop.f32.mrb[0].mxu0
        %980 = vmatprep.mubr.bf16.mxu0 0
        %981 = vmatmul.mubr.bf16.gmra.mrb[0].mxu0 %v918
        %v982 = vpop.f32.mrb[0].mxu0
        %v983 = vadd.f32 0.0, %v982
        %v984 = vpop.f32.mrb[0].mxu0
        %v985 = vpop.f32.mrb[0].mxu0
        %v986 = vadd.f32 0.0, %v985
        %v987 = vpop.f32.mrb[0].mxu0
        %988 = vmatprep.mubr.bf16.mxu0 0
        %989 = vmatmul.mubr.bf16.gmra.mrb[0].mxu0 %v919
        %v990 = vpop.f32.mrb[0].mxu0
        %v991 = vadd.f32 0.0, %v990
        %v992 = vpop.f32.mrb[0].mxu0
        %v993 = vpop.f32.mrb[0].mxu0
        %v994 = vadd.f32 0.0, %v993
        %v995 = vpop.f32.mrb[0].mxu0
        %996 = vmatprep.mubr.bf16.mxu0 0
        %997 = vmatmul.mubr.bf16.gmra.mrb[0].mxu0 %v920
        %v998 = vpop.f32.mrb[0].mxu0
        %v999 = vadd.f32 0.0, %v998
        %v1000 = vpop.f32.mrb[0].mxu0
        %v1001 = vpop.f32.mrb[0].mxu0
        %v1002 = vadd.f32 0.0, %v1001
        %v1003 = vpop.f32.mrb[0].mxu0
        %1004 = vmatprep.mubr.bf16.mxu0 0
        %1005 = vmatmul.mubr.bf16.gmra.mrb[0].mxu0 %v921
        %v1006 = vpop.f32.mrb[0].mxu0
        %v1007 = vadd.f32 0.0, %v1006
        %v1008 = vpop.f32.mrb[0].mxu0
        %v1009 = vpop.f32.mrb[0].mxu0
        %v1010 = vadd.f32 0.0, %v1009
        %v1011 = vpop.f32.mrb[0].mxu0
        %1012 = vmatprep.mubr.bf16.mxu0 0
        %1013 = vmatmul.mubr.bf16.gmra.mrb[0].mxu0 %v922
        %v1014 = vpop.f32.mrb[0].mxu0
        %v1015 = vadd.f32 0.0, %v1014
        %v1016 = vpop.f32.mrb[0].mxu0
        %v1017 = vpop.f32.mrb[0].mxu0
        %v1018 = vadd.f32 0.0, %v1017
        %v1019 = vpop.f32.mrb[0].mxu0
        %1020 = vmatprep.mubr.bf16.mxu0 0
        %1021 = vmatmul.mubr.bf16.gmra.mrb[0].mxu0 %v923
        %v1022 = vpop.f32.mrb[0].mxu0
        %v1023 = vadd.f32 0.0, %v1022
        %v1024 = vpop.f32.mrb[0].mxu0
        %v1025 = vpop.f32.mrb[0].mxu0
        %v1026 = vadd.f32 0.0, %v1025
        %v1027 = vpop.f32.mrb[0].mxu0
        %1028 = vdwg.mxu0
        %v1029 = vld [vmem:[%s565] sm:$0xff]
        %v1030 = vld [vmem:[%s565 + $0x8] sm:$0xff]
        %v1031 = vld [vmem:[%s565 + $0x10] sm:$0xff]
        %v1032 = vld [vmem:[%s565 + $0x18] sm:$0xff]
        %v1033 = vld [vmem:[%s565 + $0x20] sm:$0xff]
        %v1034 = vld [vmem:[%s565 + $0x28] sm:$0xff]
        %v1035 = vld [vmem:[%s565 + $0x30] sm:$0xff]
        %v1036 = vld [vmem:[%s565 + $0x38] sm:$0xff]
        %v1037 = vld [vmem:[%s565 + $0x40] sm:$0xff]
        %v1038 = vld [vmem:[%s565 + $0x48] sm:$0xff]
        %v1039 = vld [vmem:[%s565 + $0x50] sm:$0xff]
        %v1040 = vld [vmem:[%s565 + $0x58] sm:$0xff]
        %v1041 = vld [vmem:[%s565 + $0x60] sm:$0xff]
        %v1042 = vld [vmem:[%s565 + $0x68] sm:$0xff]
        %v1043 = vld [vmem:[%s565 + $0x70] sm:$0xff]
        %v1044 = vld [vmem:[%s565 + $0x78] sm:$0xff]
        %1046 = vset.pattern.permute.xlu0 0
        %1047 = vperm.xlu0 %1046, %v1029
        %v1048 = vpop.permute.xlu0 %1047
        %1051 = vset.pattern.permute.xlu0 0
        %1052 = vperm.xlu0 %1051, %v1030
        %v1053 = vpop.permute.xlu0 %1052
        %1056 = vset.pattern.permute.xlu0 0
        %1057 = vperm.xlu0 %1056, %v1031
        %v1058 = vpop.permute.xlu0 %1057
        %1061 = vset.pattern.permute.xlu0 0
        %1062 = vperm.xlu0 %1061, %v1032
        %v1063 = vpop.permute.xlu0 %1062
        %1066 = vset.pattern.permute.xlu0 0
        %1067 = vperm.xlu0 %1066, %v1033
        %v1068 = vpop.permute.xlu0 %1067
        %1071 = vset.pattern.permute.xlu0 0
        %1072 = vperm.xlu0 %1071, %v1034
        %v1073 = vpop.permute.xlu0 %1072
        %1076 = vset.pattern.permute.xlu0 0
        %1077 = vperm.xlu0 %1076, %v1035
        %v1078 = vpop.permute.xlu0 %1077
        %1081 = vset.pattern.permute.xlu0 0
        %1082 = vperm.xlu0 %1081, %v1036
        %v1083 = vpop.permute.xlu0 %1082
        %1086 = vset.pattern.permute.xlu0 0
        %1087 = vperm.xlu0 %1086, %v1037
        %v1088 = vpop.permute.xlu0 %1087
        %1091 = vset.pattern.permute.xlu0 0
        %1092 = vperm.xlu0 %1091, %v1038
        %v1093 = vpop.permute.xlu0 %1092
        %1096 = vset.pattern.permute.xlu0 0
        %1097 = vperm.xlu0 %1096, %v1039
        %v1098 = vpop.permute.xlu0 %1097
        %1101 = vset.pattern.permute.xlu0 0
        %1102 = vperm.xlu0 %1101, %v1040
        %v1103 = vpop.permute.xlu0 %1102
        %1106 = vset.pattern.permute.xlu0 0
        %1107 = vperm.xlu0 %1106, %v1041
        %v1108 = vpop.permute.xlu0 %1107
        %1111 = vset.pattern.permute.xlu0 0
        %1112 = vperm.xlu0 %1111, %v1042
        %v1113 = vpop.permute.xlu0 %1112
        %1116 = vset.pattern.permute.xlu0 0
        %1117 = vperm.xlu0 %1116, %v1043
        %v1118 = vpop.permute.xlu0 %1117
        %1121 = vset.pattern.permute.xlu0 0
        %1122 = vperm.xlu0 %1121, %v1044
        %v1123 = vpop.permute.xlu0 %1122
        %v1125 = vmul.f32 %v967, %v1048
        %v1126 = vmul.f32 %v970, %v1053
        %v1127 = vmul.f32 %v975, %v1058
        %v1128 = vmul.f32 %v978, %v1063
        %v1129 = vmul.f32 %v983, %v1068
        %v1130 = vmul.f32 %v986, %v1073
        %v1131 = vmul.f32 %v991, %v1078
        %v1132 = vmul.f32 %v994, %v1083
        %v1133 = vmul.f32 %v999, %v1088
        %v1134 = vmul.f32 %v1002, %v1093
        %v1135 = vmul.f32 %v1007, %v1098
        %v1136 = vmul.f32 %v1010, %v1103
        %v1137 = vmul.f32 %v1015, %v1108
        %v1138 = vmul.f32 %v1018, %v1113
        %v1139 = vmul.f32 %v1023, %v1118
        %v1140 = vmul.f32 %v1026, %v1123
        %v1141 = vld [vmem:[%s570] sm:$0xff]
        %v1142 = vld [vmem:[%s570 + $0x8] sm:$0xff]
        %v1143 = vld [vmem:[%s570 + $0x10] sm:$0xff]
        %v1144 = vld [vmem:[%s570 + $0x18] sm:$0xff]
        %v1145 = vld [vmem:[%s570 + $0x20] sm:$0xff]
        %v1146 = vld [vmem:[%s570 + $0x28] sm:$0xff]
        %v1147 = vld [vmem:[%s570 + $0x30] sm:$0xff]
        %v1148 = vld [vmem:[%s570 + $0x38] sm:$0xff]
        %v1149 = vld [vmem:[%s570 + $0x40] sm:$0xff]
        %v1150 = vld [vmem:[%s570 + $0x48] sm:$0xff]
        %v1151 = vld [vmem:[%s570 + $0x50] sm:$0xff]
        %v1152 = vld [vmem:[%s570 + $0x58] sm:$0xff]
        %v1153 = vld [vmem:[%s570 + $0x60] sm:$0xff]
        %v1154 = vld [vmem:[%s570 + $0x68] sm:$0xff]
        %v1155 = vld [vmem:[%s570 + $0x70] sm:$0xff]
        %v1156 = vld [vmem:[%s570 + $0x78] sm:$0xff]
        %v1157 = vadd.f32 %v1125, %v1141
        %v1158 = vadd.f32 %v1126, %v1142
        %v1159 = vadd.f32 %v1127, %v1143
        %v1160 = vadd.f32 %v1128, %v1144
        %v1161 = vadd.f32 %v1129, %v1145
        %v1162 = vadd.f32 %v1130, %v1146
        %v1163 = vadd.f32 %v1131, %v1147
        %v1164 = vadd.f32 %v1132, %v1148
        %v1165 = vadd.f32 %v1133, %v1149
        %v1166 = vadd.f32 %v1134, %v1150
        %v1167 = vadd.f32 %v1135, %v1151
        %v1168 = vadd.f32 %v1136, %v1152
        %v1169 = vadd.f32 %v1137, %v1153
        %v1170 = vadd.f32 %v1138, %v1154
        %v1171 = vadd.f32 %v1139, %v1155
        %v1172 = vadd.f32 %v1140, %v1156
        %v1173 = vpack.c.bf16 %v1158, %v1157
        %v1174 = vpack.c.bf16 %v1160, %v1159
        %v1175 = vpack.c.bf16 %v1162, %v1161
        %v1176 = vpack.c.bf16 %v1164, %v1163
        %v1177 = vpack.c.bf16 %v1166, %v1165
        %v1178 = vpack.c.bf16 %v1168, %v1167
        %v1179 = vpack.c.bf16 %v1170, %v1169
        %v1180 = vpack.c.bf16 %v1172, %v1171
        %v1181 = vld [vmem:[#allocation9] sm:$0xf]
        %v1182 = vld [vmem:[#allocation9 + $0x4] sm:$0xf]
        %v1183 = vld [vmem:[#allocation9 + $0x8] sm:$0xf]
        %v1184 = vld [vmem:[#allocation9 + $0xc] sm:$0xf]
        %v1185 = vld [vmem:[#allocation9 + $0x10] sm:$0xf]
        %v1186 = vld [vmem:[#allocation9 + $0x14] sm:$0xf]
        %v1187 = vld [vmem:[#allocation9 + $0x18] sm:$0xf]
        %v1188 = vld [vmem:[#allocation9 + $0x1c] sm:$0xf]
        %v1189 = vld [vmem:[#allocation9 + $0x20] sm:$0xf]
        %v1190 = vld [vmem:[#allocation9 + $0x24] sm:$0xf]
        %v1191 = vld [vmem:[#allocation9 + $0x28] sm:$0xf]
        %v1192 = vld [vmem:[#allocation9 + $0x2c] sm:$0xf]
        %v1193 = vld [vmem:[#allocation9 + $0x30] sm:$0xf]
        %v1194 = vld [vmem:[#allocation9 + $0x34] sm:$0xf]
        %v1195 = vld [vmem:[#allocation9 + $0x38] sm:$0xf]
        %v1196 = vld [vmem:[#allocation9 + $0x3c] sm:$0xf]
        %v1197 = vld [vmem:[%s7] sm:$0x1]
        %v1199 = vlaneseq
        %v1200 = vshrl.u32 %v1199, 7
        %v1201 = vsub.s32 0, %v1200
        %v1202 = vrot.slane %v1197, %v1201
        %v1220 = vunpack.c.l.b16 %v1181
        %v1221 = vunpack.c.l.b16 %v1182
        %v1222 = vunpack.c.l.b16 %v1183
        %v1223 = vunpack.c.l.b16 %v1184
        %v1224 = vunpack.c.l.b16 %v1185
        %v1225 = vunpack.c.l.b16 %v1186
        %v1226 = vunpack.c.l.b16 %v1187
        %v1227 = vunpack.c.l.b16 %v1188
        %v1228 = vunpack.c.l.b16 %v1189
        %v1229 = vunpack.c.l.b16 %v1190
        %v1230 = vunpack.c.l.b16 %v1191
        %v1231 = vunpack.c.l.b16 %v1192
        %v1232 = vunpack.c.l.b16 %v1193
        %v1233 = vunpack.c.l.b16 %v1194
        %v1234 = vunpack.c.l.b16 %v1195
        %v1235 = vunpack.c.l.b16 %v1196
        %v1236 = vpack.c.b16 %v1221, %v1220
        %v1237 = vpack.c.b16 %v1223, %v1222
        %v1238 = vpack.c.b16 %v1225, %v1224
        %v1239 = vpack.c.b16 %v1227, %v1226
        %v1240 = vpack.c.b16 %v1229, %v1228
        %v1241 = vpack.c.b16 %v1231, %v1230
        %v1242 = vpack.c.b16 %v1233, %v1232
        %v1243 = vpack.c.b16 %v1235, %v1234
        %1252 = vmatprep.subr.bf16.mxu0 0
        %1253 = vmatpush1.bf16.msra.mxu0 %v1236
        %1254 = vmatprep.subr.bf16.mxu0 0
        %1255 = vmatpush1.bf16.msra.mxu0 %v1237
        %1256 = vmatprep.subr.bf16.mxu0 0
        %1257 = vmatpush1.bf16.msra.mxu0 %v1238
        %1258 = vmatprep.subr.bf16.mxu0 0
        %1259 = vmatpush1.bf16.msra.mxu0 %v1239
        %1260 = vmatprep.subr.bf16.mxu0 0
        %1261 = vmatpush1.bf16.msra.mxu0 %v1240
        %1262 = vmatprep.subr.bf16.mxu0 0
        %1263 = vmatpush1.bf16.msra.mxu0 %v1241
        %1264 = vmatprep.subr.bf16.mxu0 0
        %1265 = vmatpush1.bf16.msra.mxu0 %v1242
        %1266 = vmatprep.subr.bf16.mxu0 0
        %1267 = vmatpush1.bf16.msra.mxu0 %v1243
        %1268 = vmatprep.subr.bf16.mxu0 0
        %1269 = vmatpush1.bf16.msra.mxu0 0
        %1270 = vmatprep.subr.bf16.mxu0 0
        %1271 = vmatpush1.bf16.msra.mxu0 0
        %1272 = vmatprep.subr.bf16.mxu0 0
        %1273 = vmatpush1.bf16.msra.mxu0 0
        %1274 = vmatprep.subr.bf16.mxu0 0
        %1275 = vmatpush1.bf16.msra.mxu0 0
        %1276 = vmatprep.subr.bf16.mxu0 0
        %1277 = vmatpush1.bf16.msra.mxu0 0
        %1278 = vmatprep.subr.bf16.mxu0 0
        %1279 = vmatpush1.bf16.msra.mxu0 0
        %1280 = vmatprep.subr.bf16.mxu0 0
        %1281 = vmatpush1.bf16.msra.mxu0 0
        %1282 = vmatprep.subr.bf16.mxu0 0
        %1283 = vmatpush1.bf16.msra.mxu0 0
        %1284 = vmatprep.mubr.bf16.mxu0 0
        %1285 = vmatmul.mubr.bf16.gmra.mrb[0].mxu0 %v1173
        %v1286 = vpop.f32.mrb[0].mxu0
        %v1287 = vadd.f32 %v1202, %v1286
        %v1288 = vpop.f32.mrb[0].mxu0
        %v1289 = vpop.f32.mrb[0].mxu0
        %v1290 = vadd.f32 %v1202, %v1289
        %v1291 = vpop.f32.mrb[0].mxu0
        %1292 = vmatprep.mubr.bf16.mxu0 0
        %1293 = vmatmul.mubr.bf16.gmra.mrb[0].mxu0 %v1174
        %v1294 = vpop.f32.mrb[0].mxu0
        %v1295 = vadd.f32 %v1202, %v1294
        %v1296 = vpop.f32.mrb[0].mxu0
        %v1297 = vpop.f32.mrb[0].mxu0
        %v1298 = vadd.f32 %v1202, %v1297
        %v1299 = vpop.f32.mrb[0].mxu0
        %1300 = vmatprep.mubr.bf16.mxu0 0
        %1301 = vmatmul.mubr.bf16.gmra.mrb[0].mxu0 %v1175
        %v1302 = vpop.f32.mrb[0].mxu0
        %v1303 = vadd.f32 %v1202, %v1302
        %v1304 = vpop.f32.mrb[0].mxu0
        %v1305 = vpop.f32.mrb[0].mxu0
        %v1306 = vadd.f32 %v1202, %v1305
        %v1307 = vpop.f32.mrb[0].mxu0
        %1308 = vmatprep.mubr.bf16.mxu0 0
        %1309 = vmatmul.mubr.bf16.gmra.mrb[0].mxu0 %v1176
        %v1310 = vpop.f32.mrb[0].mxu0
        %v1311 = vadd.f32 %v1202, %v1310
        %v1312 = vpop.f32.mrb[0].mxu0
        %v1313 = vpop.f32.mrb[0].mxu0
        %v1314 = vadd.f32 %v1202, %v1313
        %v1315 = vpop.f32.mrb[0].mxu0
        %1316 = vmatprep.mubr.bf16.mxu0 0
        %1317 = vmatmul.mubr.bf16.gmra.mrb[0].mxu0 %v1177
        %v1318 = vpop.f32.mrb[0].mxu0
        %v1319 = vadd.f32 %v1202, %v1318
        %v1320 = vpop.f32.mrb[0].mxu0
        %v1321 = vpop.f32.mrb[0].mxu0
        %v1322 = vadd.f32 %v1202, %v1321
        %v1323 = vpop.f32.mrb[0].mxu0
        %1324 = vmatprep.mubr.bf16.mxu0 0
        %1325 = vmatmul.mubr.bf16.gmra.mrb[0].mxu0 %v1178
        %v1326 = vpop.f32.mrb[0].mxu0
        %v1327 = vadd.f32 %v1202, %v1326
        %v1328 = vpop.f32.mrb[0].mxu0
        %v1329 = vpop.f32.mrb[0].mxu0
        %v1330 = vadd.f32 %v1202, %v1329
        %v1331 = vpop.f32.mrb[0].mxu0
        %1332 = vmatprep.mubr.bf16.mxu0 0
        %1333 = vmatmul.mubr.bf16.gmra.mrb[0].mxu0 %v1179
        %v1334 = vpop.f32.mrb[0].mxu0
        %v1335 = vadd.f32 %v1202, %v1334
        %v1336 = vpop.f32.mrb[0].mxu0
        %v1337 = vpop.f32.mrb[0].mxu0
        %v1338 = vadd.f32 %v1202, %v1337
        %v1339 = vpop.f32.mrb[0].mxu0
        %1340 = vmatprep.mubr.bf16.mxu0 0
        %1341 = vmatmul.mubr.bf16.gmra.mrb[0].mxu0 %v1180
        %v1342 = vpop.f32.mrb[0].mxu0
        %v1343 = vadd.f32 %v1202, %v1342
        %v1344 = vpop.f32.mrb[0].mxu0
        %v1345 = vpop.f32.mrb[0].mxu0
        %v1346 = vadd.f32 %v1202, %v1345
        %v1347 = vpop.f32.mrb[0].mxu0
        %1348 = vdwg.mxu0
        %v1349 = vmax.f32 %v1287, 0.0
        %v1350 = vmax.f32 %v1290, 0.0
        %v1351 = vmax.f32 %v1295, 0.0
        %v1352 = vmax.f32 %v1298, 0.0
        %v1353 = vmax.f32 %v1303, 0.0
        %v1354 = vmax.f32 %v1306, 0.0
        %v1355 = vmax.f32 %v1311, 0.0
        %v1356 = vmax.f32 %v1314, 0.0
        %v1357 = vmax.f32 %v1319, 0.0
        %v1358 = vmax.f32 %v1322, 0.0
        %v1359 = vmax.f32 %v1327, 0.0
        %v1360 = vmax.f32 %v1330, 0.0
        %v1361 = vmax.f32 %v1335, 0.0
        %v1362 = vmax.f32 %v1338, 0.0
        %v1363 = vmax.f32 %v1343, 0.0
        %v1364 = vmax.f32 %v1346, 0.0
        %v1365 = vpack.c.bf16 %v1350, %v1349
        %v1366 = vpack.c.bf16 %v1352, %v1351
        %v1367 = vpack.c.bf16 %v1354, %v1353
        %v1368 = vpack.c.bf16 %v1356, %v1355
        %v1369 = vpack.c.bf16 %v1358, %v1357
        %v1370 = vpack.c.bf16 %v1360, %v1359
        %v1371 = vpack.c.bf16 %v1362, %v1361
        %v1372 = vpack.c.bf16 %v1364, %v1363
        %v1373 = vld [vmem:[#allocation11] sm:$0xf]
        %v1374 = vld [vmem:[#allocation11 + $0x4] sm:$0xf]
        %v1375 = vld [vmem:[#allocation11 + $0x8] sm:$0xf]
        %v1376 = vld [vmem:[#allocation11 + $0xc] sm:$0xf]
        %v1377 = vld [vmem:[#allocation11 + $0x10] sm:$0xf]
        %v1378 = vld [vmem:[#allocation11 + $0x14] sm:$0xf]
        %v1379 = vld [vmem:[#allocation11 + $0x18] sm:$0xf]
        %v1380 = vld [vmem:[#allocation11 + $0x1c] sm:$0xf]
        %v1381 = vld [vmem:[#allocation11 + $0x20] sm:$0xf]
        %v1382 = vld [vmem:[#allocation11 + $0x24] sm:$0xf]
        %v1383 = vld [vmem:[#allocation11 + $0x28] sm:$0xf]
        %v1384 = vld [vmem:[#allocation11 + $0x2c] sm:$0xf]
        %v1385 = vld [vmem:[#allocation11 + $0x30] sm:$0xf]
        %v1386 = vld [vmem:[#allocation11 + $0x34] sm:$0xf]
        %v1387 = vld [vmem:[#allocation11 + $0x38] sm:$0xf]
        %v1388 = vld [vmem:[#allocation11 + $0x3c] sm:$0xf]
        %v1389 = vld [vmem:[%s9] sm:$0x1]
        %v1391 = vlaneseq
        %v1392 = vshrl.u32 %v1391, 7
        %v1393 = vsub.s32 0, %v1392
        %v1394 = vrot.slane %v1389, %v1393
        %v1412 = vunpack.c.l.b16 %v1373
        %v1413 = vunpack.c.l.b16 %v1374
        %v1414 = vunpack.c.l.b16 %v1375
        %v1415 = vunpack.c.l.b16 %v1376
        %v1416 = vunpack.c.l.b16 %v1377
        %v1417 = vunpack.c.l.b16 %v1378
        %v1418 = vunpack.c.l.b16 %v1379
        %v1419 = vunpack.c.l.b16 %v1380
        %v1420 = vunpack.c.l.b16 %v1381
        %v1421 = vunpack.c.l.b16 %v1382
        %v1422 = vunpack.c.l.b16 %v1383
        %v1423 = vunpack.c.l.b16 %v1384
        %v1424 = vunpack.c.l.b16 %v1385
        %v1425 = vunpack.c.l.b16 %v1386
        %v1426 = vunpack.c.l.b16 %v1387
        %v1427 = vunpack.c.l.b16 %v1388
        %v1428 = vpack.c.b16 %v1413, %v1412
        %v1429 = vpack.c.b16 %v1415, %v1414
        %v1430 = vpack.c.b16 %v1417, %v1416
        %v1431 = vpack.c.b16 %v1419, %v1418
        %v1432 = vpack.c.b16 %v1421, %v1420
        %v1433 = vpack.c.b16 %v1423, %v1422
        %v1434 = vpack.c.b16 %v1425, %v1424
        %v1435 = vpack.c.b16 %v1427, %v1426
        %1444 = vmatprep.subr.bf16.mxu0 0
        %1445 = vmatpush1.bf16.msra.mxu0 %v1428
        %1446 = vmatprep.subr.bf16.mxu0 0
        %1447 = vmatpush1.bf16.msra.mxu0 %v1429
        %1448 = vmatprep.subr.bf16.mxu0 0
        %1449 = vmatpush1.bf16.msra.mxu0 %v1430
        %1450 = vmatprep.subr.bf16.mxu0 0
        %1451 = vmatpush1.bf16.msra.mxu0 %v1431
        %1452 = vmatprep.subr.bf16.mxu0 0
        %1453 = vmatpush1.bf16.msra.mxu0 %v1432
        %1454 = vmatprep.subr.bf16.mxu0 0
        %1455 = vmatpush1.bf16.msra.mxu0 %v1433
        %1456 = vmatprep.subr.bf16.mxu0 0
        %1457 = vmatpush1.bf16.msra.mxu0 %v1434
        %1458 = vmatprep.subr.bf16.mxu0 0
        %1459 = vmatpush1.bf16.msra.mxu0 %v1435
        %1460 = vmatprep.subr.bf16.mxu0 0
        %1461 = vmatpush1.bf16.msra.mxu0 0
        %1462 = vmatprep.subr.bf16.mxu0 0
        %1463 = vmatpush1.bf16.msra.mxu0 0
        %1464 = vmatprep.subr.bf16.mxu0 0
        %1465 = vmatpush1.bf16.msra.mxu0 0
        %1466 = vmatprep.subr.bf16.mxu0 0
        %1467 = vmatpush1.bf16.msra.mxu0 0
        %1468 = vmatprep.subr.bf16.mxu0 0
        %1469 = vmatpush1.bf16.msra.mxu0 0
        %1470 = vmatprep.subr.bf16.mxu0 0
        %1471 = vmatpush1.bf16.msra.mxu0 0
        %1472 = vmatprep.subr.bf16.mxu0 0
        %1473 = vmatpush1.bf16.msra.mxu0 0
        %1474 = vmatprep.subr.bf16.mxu0 0
        %1475 = vmatpush1.bf16.msra.mxu0 0
        %1476 = vmatprep.mubr.bf16.mxu0 0
        %1477 = vmatmul.mubr.bf16.gmra.mrb[0].mxu0 %v1365
        %v1478 = vpop.f32.mrb[0].mxu0
        %v1479 = vadd.f32 %v1394, %v1478
        %v1480 = vpop.f32.mrb[0].mxu0
        %v1481 = vpop.f32.mrb[0].mxu0
        %v1482 = vadd.f32 %v1394, %v1481
        %v1483 = vpop.f32.mrb[0].mxu0
        %1484 = vmatprep.mubr.bf16.mxu0 0
        %1485 = vmatmul.mubr.bf16.gmra.mrb[0].mxu0 %v1366
        %v1486 = vpop.f32.mrb[0].mxu0
        %v1487 = vadd.f32 %v1394, %v1486
        %v1488 = vpop.f32.mrb[0].mxu0
        %v1489 = vpop.f32.mrb[0].mxu0
        %v1490 = vadd.f32 %v1394, %v1489
        %v1491 = vpop.f32.mrb[0].mxu0
        %1492 = vmatprep.mubr.bf16.mxu0 0
        %1493 = vmatmul.mubr.bf16.gmra.mrb[0].mxu0 %v1367
        %v1494 = vpop.f32.mrb[0].mxu0
        %v1495 = vadd.f32 %v1394, %v1494
        %v1496 = vpop.f32.mrb[0].mxu0
        %v1497 = vpop.f32.mrb[0].mxu0
        %v1498 = vadd.f32 %v1394, %v1497
        %v1499 = vpop.f32.mrb[0].mxu0
        %1500 = vmatprep.mubr.bf16.mxu0 0
        %1501 = vmatmul.mubr.bf16.gmra.mrb[0].mxu0 %v1368
        %v1502 = vpop.f32.mrb[0].mxu0
        %v1503 = vadd.f32 %v1394, %v1502
        %v1504 = vpop.f32.mrb[0].mxu0
        %v1505 = vpop.f32.mrb[0].mxu0
        %v1506 = vadd.f32 %v1394, %v1505
        %v1507 = vpop.f32.mrb[0].mxu0
        %1508 = vmatprep.mubr.bf16.mxu0 0
        %1509 = vmatmul.mubr.bf16.gmra.mrb[0].mxu0 %v1369
        %v1510 = vpop.f32.mrb[0].mxu0
        %v1511 = vadd.f32 %v1394, %v1510
        %v1512 = vpop.f32.mrb[0].mxu0
        %v1513 = vpop.f32.mrb[0].mxu0
        %v1514 = vadd.f32 %v1394, %v1513
        %v1515 = vpop.f32.mrb[0].mxu0
        %1516 = vmatprep.mubr.bf16.mxu0 0
        %1517 = vmatmul.mubr.bf16.gmra.mrb[0].mxu0 %v1370
        %v1518 = vpop.f32.mrb[0].mxu0
        %v1519 = vadd.f32 %v1394, %v1518
        %v1520 = vpop.f32.mrb[0].mxu0
        %v1521 = vpop.f32.mrb[0].mxu0
        %v1522 = vadd.f32 %v1394, %v1521
        %v1523 = vpop.f32.mrb[0].mxu0
        %1524 = vmatprep.mubr.bf16.mxu0 0
        %1525 = vmatmul.mubr.bf16.gmra.mrb[0].mxu0 %v1371
        %v1526 = vpop.f32.mrb[0].mxu0
        %v1527 = vadd.f32 %v1394, %v1526
        %v1528 = vpop.f32.mrb[0].mxu0
        %v1529 = vpop.f32.mrb[0].mxu0
        %v1530 = vadd.f32 %v1394, %v1529
        %v1531 = vpop.f32.mrb[0].mxu0
        %1532 = vmatprep.mubr.bf16.mxu0 0
        %1533 = vmatmul.mubr.bf16.gmra.mrb[0].mxu0 %v1372
        %v1534 = vpop.f32.mrb[0].mxu0
        %v1535 = vadd.f32 %v1394, %v1534
        %v1536 = vpop.f32.mrb[0].mxu0
        %v1537 = vpop.f32.mrb[0].mxu0
        %v1538 = vadd.f32 %v1394, %v1537
        %v1539 = vpop.f32.mrb[0].mxu0
        %1540 = vdwg.mxu0
        %v1541 = vpack.c.bf16 %v1482, %v1479
        %v1542 = vpack.c.bf16 %v1490, %v1487
        %v1543 = vpack.c.bf16 %v1498, %v1495
        %v1544 = vpack.c.bf16 %v1506, %v1503
        %v1545 = vpack.c.bf16 %v1514, %v1511
        %v1546 = vpack.c.bf16 %v1522, %v1519
        %v1547 = vpack.c.bf16 %v1530, %v1527
        %v1548 = vpack.c.bf16 %v1538, %v1535
        %v1549 = vld [vmem:[#allocation12] sm:$0xf]
        %v1550 = vld [vmem:[#allocation12 + $0x4] sm:$0xf]
        %v1551 = vld [vmem:[#allocation12 + $0x8] sm:$0xf]
        %v1552 = vld [vmem:[#allocation12 + $0xc] sm:$0xf]
        %v1553 = vld [vmem:[#allocation12 + $0x10] sm:$0xf]
        %v1554 = vld [vmem:[#allocation12 + $0x14] sm:$0xf]
        %v1555 = vld [vmem:[#allocation12 + $0x18] sm:$0xf]
        %v1556 = vld [vmem:[#allocation12 + $0x1c] sm:$0xf]
        %v1557 = vld [vmem:[#allocation12 + $0x20] sm:$0xf]
        %v1558 = vld [vmem:[#allocation12 + $0x24] sm:$0xf]
        %v1559 = vld [vmem:[#allocation12 + $0x28] sm:$0xf]
        %v1560 = vld [vmem:[#allocation12 + $0x2c] sm:$0xf]
        %v1561 = vld [vmem:[#allocation12 + $0x30] sm:$0xf]
        %v1562 = vld [vmem:[#allocation12 + $0x34] sm:$0xf]
        %v1563 = vld [vmem:[#allocation12 + $0x38] sm:$0xf]
        %v1564 = vld [vmem:[#allocation12 + $0x3c] sm:$0xf]
        %v1565 = vld [vmem:[%s11] sm:$0x1]
        %v1567 = vlaneseq
        %v1568 = vshrl.u32 %v1567, 7
        %v1569 = vsub.s32 0, %v1568
        %v1570 = vrot.slane %v1565, %v1569
        %v1588 = vunpack.c.l.b16 %v1549
        %v1589 = vunpack.c.l.b16 %v1550
        %v1590 = vunpack.c.l.b16 %v1551
        %v1591 = vunpack.c.l.b16 %v1552
        %v1592 = vunpack.c.l.b16 %v1553
        %v1593 = vunpack.c.l.b16 %v1554
        %v1594 = vunpack.c.l.b16 %v1555
        %v1595 = vunpack.c.l.b16 %v1556
        %v1596 = vunpack.c.l.b16 %v1557
        %v1597 = vunpack.c.l.b16 %v1558
        %v1598 = vunpack.c.l.b16 %v1559
        %v1599 = vunpack.c.l.b16 %v1560
        %v1600 = vunpack.c.l.b16 %v1561
        %v1601 = vunpack.c.l.b16 %v1562
        %v1602 = vunpack.c.l.b16 %v1563
        %v1603 = vunpack.c.l.b16 %v1564
        %v1604 = vpack.c.b16 %v1589, %v1588
        %v1605 = vpack.c.b16 %v1591, %v1590
        %v1606 = vpack.c.b16 %v1593, %v1592
        %v1607 = vpack.c.b16 %v1595, %v1594
        %v1608 = vpack.c.b16 %v1597, %v1596
        %v1609 = vpack.c.b16 %v1599, %v1598
        %v1610 = vpack.c.b16 %v1601, %v1600
        %v1611 = vpack.c.b16 %v1603, %v1602
        %1620 = vmatprep.subr.bf16.mxu0 0
        %1621 = vmatpush1.bf16.msra.mxu0 %v1604
        %1622 = vmatprep.subr.bf16.mxu0 0
        %1623 = vmatpush1.bf16.msra.mxu0 %v1605
        %1624 = vmatprep.subr.bf16.mxu0 0
        %1625 = vmatpush1.bf16.msra.mxu0 %v1606
        %1626 = vmatprep.subr.bf16.mxu0 0
        %1627 = vmatpush1.bf16.msra.mxu0 %v1607
        %1628 = vmatprep.subr.bf16.mxu0 0
        %1629 = vmatpush1.bf16.msra.mxu0 %v1608
        %1630 = vmatprep.subr.bf16.mxu0 0
        %1631 = vmatpush1.bf16.msra.mxu0 %v1609
        %1632 = vmatprep.subr.bf16.mxu0 0
        %1633 = vmatpush1.bf16.msra.mxu0 %v1610
        %1634 = vmatprep.subr.bf16.mxu0 0
        %1635 = vmatpush1.bf16.msra.mxu0 %v1611
        %1636 = vmatprep.subr.bf16.mxu0 0
        %1637 = vmatpush1.bf16.msra.mxu0 0
        %1638 = vmatprep.subr.bf16.mxu0 0
        %1639 = vmatpush1.bf16.msra.mxu0 0
        %1640 = vmatprep.subr.bf16.mxu0 0
        %1641 = vmatpush1.bf16.msra.mxu0 0
        %1642 = vmatprep.subr.bf16.mxu0 0
        %1643 = vmatpush1.bf16.msra.mxu0 0
        %1644 = vmatprep.subr.bf16.mxu0 0
        %1645 = vmatpush1.bf16.msra.mxu0 0
        %1646 = vmatprep.subr.bf16.mxu0 0
        %1647 = vmatpush1.bf16.msra.mxu0 0
        %1648 = vmatprep.subr.bf16.mxu0 0
        %1649 = vmatpush1.bf16.msra.mxu0 0
        %1650 = vmatprep.subr.bf16.mxu0 0
        %1651 = vmatpush1.bf16.msra.mxu0 0
        %1652 = vmatprep.mubr.bf16.mxu0 0
        %1653 = vmatmul.mubr.bf16.gmra.mrb[0].mxu0 %v1541
        %v1654 = vpop.f32.mrb[0].mxu0
        %v1655 = vadd.f32 %v1570, %v1654
        %v1656 = vpop.f32.mrb[0].mxu0
        %v1657 = vpop.f32.mrb[0].mxu0
        %v1658 = vadd.f32 %v1570, %v1657
        %v1659 = vpop.f32.mrb[0].mxu0
        %1660 = vmatprep.mubr.bf16.mxu0 0
        %1661 = vmatmul.mubr.bf16.gmra.mrb[0].mxu0 %v1542
        %v1662 = vpop.f32.mrb[0].mxu0
        %v1663 = vadd.f32 %v1570, %v1662
        %v1664 = vpop.f32.mrb[0].mxu0
        %v1665 = vpop.f32.mrb[0].mxu0
        %v1666 = vadd.f32 %v1570, %v1665
        %v1667 = vpop.f32.mrb[0].mxu0
        %1668 = vmatprep.mubr.bf16.mxu0 0
        %1669 = vmatmul.mubr.bf16.gmra.mrb[0].mxu0 %v1543
        %v1670 = vpop.f32.mrb[0].mxu0
        %v1671 = vadd.f32 %v1570, %v1670
        %v1672 = vpop.f32.mrb[0].mxu0
        %v1673 = vpop.f32.mrb[0].mxu0
        %v1674 = vadd.f32 %v1570, %v1673
        %v1675 = vpop.f32.mrb[0].mxu0
        %1676 = vmatprep.mubr.bf16.mxu0 0
        %1677 = vmatmul.mubr.bf16.gmra.mrb[0].mxu0 %v1544
        %v1678 = vpop.f32.mrb[0].mxu0
        %v1679 = vadd.f32 %v1570, %v1678
        %v1680 = vpop.f32.mrb[0].mxu0
        %v1681 = vpop.f32.mrb[0].mxu0
        %v1682 = vadd.f32 %v1570, %v1681
        %v1683 = vpop.f32.mrb[0].mxu0
        %1684 = vmatprep.mubr.bf16.mxu0 0
        %1685 = vmatmul.mubr.bf16.gmra.mrb[0].mxu0 %v1545
        %v1686 = vpop.f32.mrb[0].mxu0
        %v1687 = vadd.f32 %v1570, %v1686
        %v1688 = vpop.f32.mrb[0].mxu0
        %v1689 = vpop.f32.mrb[0].mxu0
        %v1690 = vadd.f32 %v1570, %v1689
        %v1691 = vpop.f32.mrb[0].mxu0
        %1692 = vmatprep.mubr.bf16.mxu0 0
        %1693 = vmatmul.mubr.bf16.gmra.mrb[0].mxu0 %v1546
        %v1694 = vpop.f32.mrb[0].mxu0
        %v1695 = vadd.f32 %v1570, %v1694
        %v1696 = vpop.f32.mrb[0].mxu0
        %v1697 = vpop.f32.mrb[0].mxu0
        %v1698 = vadd.f32 %v1570, %v1697
        %v1699 = vpop.f32.mrb[0].mxu0
        %1700 = vmatprep.mubr.bf16.mxu0 0
        %1701 = vmatmul.mubr.bf16.gmra.mrb[0].mxu0 %v1547
        %v1702 = vpop.f32.mrb[0].mxu0
        %v1703 = vadd.f32 %v1570, %v1702
        %v1704 = vpop.f32.mrb[0].mxu0
        %v1705 = vpop.f32.mrb[0].mxu0
        %v1706 = vadd.f32 %v1570, %v1705
        %v1707 = vpop.f32.mrb[0].mxu0
        %1708 = vmatprep.mubr.bf16.mxu0 0
        %1709 = vmatmul.mubr.bf16.gmra.mrb[0].mxu0 %v1548
        %v1710 = vpop.f32.mrb[0].mxu0
        %v1711 = vadd.f32 %v1570, %v1710
        %v1712 = vpop.f32.mrb[0].mxu0
        %v1713 = vpop.f32.mrb[0].mxu0
        %v1714 = vadd.f32 %v1570, %v1713
        %v1715 = vpop.f32.mrb[0].mxu0
        %1716 = vdwg.mxu0
        %v1717 = vpack.c.bf16 %v1658, %v1655
        %v1718 = vpack.c.bf16 %v1666, %v1663
        %v1719 = vpack.c.bf16 %v1674, %v1671
        %v1720 = vpack.c.bf16 %v1682, %v1679
        %v1721 = vpack.c.bf16 %v1690, %v1687
        %v1722 = vpack.c.bf16 %v1698, %v1695
        %v1723 = vpack.c.bf16 %v1706, %v1703
        %v1724 = vpack.c.bf16 %v1714, %v1711
        %v1733 = vunpack.c.l.b16 %v1717
        %v1734 = vunpack.c.h.b16 %v1717
        %v1735 = vunpack.c.l.b16 %v1718
        %v1736 = vunpack.c.h.b16 %v1718
        %v1737 = vunpack.c.l.b16 %v1719
        %v1738 = vunpack.c.h.b16 %v1719
        %v1739 = vunpack.c.l.b16 %v1720
        %v1740 = vunpack.c.h.b16 %v1720
        %v1741 = vunpack.c.l.b16 %v1721
        %v1742 = vunpack.c.h.b16 %v1721
        %v1743 = vunpack.c.l.b16 %v1722
        %v1744 = vunpack.c.h.b16 %v1722
        %v1745 = vunpack.c.l.b16 %v1723
        %v1746 = vunpack.c.h.b16 %v1723
        %v1747 = vunpack.c.l.b16 %v1724
        %v1748 = vunpack.c.h.b16 %v1724
        %v1749 = vpack.c.b16 %v1733, %v1733
        %v1750 = vpack.c.b16 %v1734, %v1734
        %v1751 = vpack.c.b16 %v1735, %v1735
        %v1752 = vpack.c.b16 %v1736, %v1736
        %v1753 = vpack.c.b16 %v1737, %v1737
        %v1754 = vpack.c.b16 %v1738, %v1738
        %v1755 = vpack.c.b16 %v1739, %v1739
        %v1756 = vpack.c.b16 %v1740, %v1740
        %v1757 = vpack.c.b16 %v1741, %v1741
        %v1758 = vpack.c.b16 %v1742, %v1742
        %v1759 = vpack.c.b16 %v1743, %v1743
        %v1760 = vpack.c.b16 %v1744, %v1744
        %v1761 = vpack.c.b16 %v1745, %v1745
        %v1762 = vpack.c.b16 %v1746, %v1746
        %v1763 = vpack.c.b16 %v1747, %v1747
        %v1764 = vpack.c.b16 %v1748, %v1748
        %1781 = vst [vmem:[%s560] sm:$0xf] %v1749
        %1782 = vst [vmem:[%s560 + $0x4] sm:$0xf] %v1750
        %1783 = vst [vmem:[%s560 + $0x8] sm:$0xf] %v1751
        %1784 = vst [vmem:[%s560 + $0xc] sm:$0xf] %v1752
        %1785 = vst [vmem:[%s560 + $0x10] sm:$0xf] %v1753
        %1786 = vst [vmem:[%s560 + $0x14] sm:$0xf] %v1754
        %1787 = vst [vmem:[%s560 + $0x18] sm:$0xf] %v1755
        %1788 = vst [vmem:[%s560 + $0x1c] sm:$0xf] %v1756
        %1789 = vst [vmem:[%s560 + $0x20] sm:$0xf] %v1757
        %1790 = vst [vmem:[%s560 + $0x24] sm:$0xf] %v1758
        %1791 = vst [vmem:[%s560 + $0x28] sm:$0xf] %v1759
        %1792 = vst [vmem:[%s560 + $0x2c] sm:$0xf] %v1760
        %1793 = vst [vmem:[%s560 + $0x30] sm:$0xf] %v1761
        %1794 = vst [vmem:[%s560 + $0x34] sm:$0xf] %v1762
        %1795 = vst [vmem:[%s560 + $0x38] sm:$0xf] %v1763
        %1796 = vst [vmem:[%s560 + $0x3c] sm:$0xf] %v1764
        %s1797 = sand.u32 %s315, 1
        %s1798 = scalar_lea.sflag [#allocation5], %s1797
        %s1799 = sand.u32 %s315, 1
        %s1800 = smul.addr %s1799, 64
        %s1801 = scalar_lea.vmem [#allocation14], %s1800
        // Predicated region
        $region93: #{tpu_custom_call.1} parent=67 // pred_check
          %p1802 = pneg %p325
        $region94: #{tpu_custom_call.1} parent=67 // pred_check_branch
          %1804 = sbr.rel (%p1802) target = $region96
        $region95: #{tpu_custom_call.1} parent=67 // pred_region
          %s1806 = ssub.s32 1024, 1024
          %1807 = vsyncadd %s1798, %s1806
          %s1808 = smul.addr %s35, 16
          %s1809 = smul.addr %s1808, 64
          %s1810 = scalar_lea.hbm %s12, %s1809
          %s1811 = sshll.u32 %s1801, 4
          %s1812 = int_to_ptr.vmem [resolvable:$true] %s1811
          %1817 = dma.vmem_to_hbm [thread:$0]  %s1812, 1024, %s1810, %s1798, 64, 64, 4
        $region96: #{tpu_custom_call.1} parent=67 // pred_fallthru
          _
      $region68: #{tpu_custom_call.1} parent=5 // pred_fallthru
        _
      %p1818 = scmp.le.s32.totalorder 2, %s30
      // Predicated region
      $region97: #{tpu_custom_call.1} parent=5 // pred_check
        %p1819 = pneg %p1818
      $region98: #{tpu_custom_call.1} parent=5 // pred_check_branch
        %1821 = sbr.rel (%p1819) target = $region100
      $region99: #{tpu_custom_call.1} parent=5 // pred_region
        %s1822 = ssub.s32 %s30, 2
        // Predicated region
        $region101: #{tpu_custom_call.1} parent=99 // pred_check
          %p1823 = pneg %p331
        $region102: #{tpu_custom_call.1} parent=99 // pred_check_branch
          %1825 = sbr.rel (%p1823) target = $region104
        $region103: #{tpu_custom_call.1} parent=99 // pred_region
          %s1826 = sand.u32 %s316, 1
          %s1827 = scalar_lea.sflag [#allocation5], %s1826
          %s1828 = sand.u32 %s316, 1
          %s1829 = smul.addr %s1828, 64
          %s1830 = scalar_lea.vmem [#allocation14], %s1829
          %1831 = dma.done %s1827, 1024
        $region104: #{tpu_custom_call.1} parent=99 // pred_fallthru
          _
      $region100: #{tpu_custom_call.1} parent=5 // pred_fallthru
        _
    $region6: #{tpu_custom_call.1} parent=1 // loop_footer
      %s34 = sadd.s32 1, %s30
    $region7: #{tpu_custom_call.1} parent=1 // loop_footer_branch
      %29 = sbr.rel target = $region3
    $region8: #{tpu_custom_call.1} parent=1 // loop_exit
      _
    %1832 = vsyncpa [#allocation4], 1
    %s1833 = scalar_lea.sflag [#allocation4], 1
    %1834 = vsyncpa %s1833, 1
    %1835 = vsyncpa [#allocation7], 1
    %s1836 = scalar_lea.sflag [#allocation7], 1
    %1837 = vsyncpa %s1836, 1
    %1838 = vsyncpa [#allocation10], 1
    %1839 = vsyncpa [#allocation13], 1
    %1840 = vsyncpa [#allocation5], 1
    %s1841 = scalar_lea.sflag [#allocation5], 1
    %1842 = vsyncpa %s1841, 1

</llo_original>
